<compile_context>
chip_gen: v7x
topology: tpu7x:2x2x1
jax: 0.10.0
libtpu: 0.0.40
codegen_flags: <defaults>
</compile_context>

<pallas_src>
import jax
import jax.numpy as jnp
from jax.experimental import pallas as pl
from jax.experimental.pallas import tpu as pltpu

IN_DIM = 7
AUG_IN = 8          # features padded to 8 sublanes; row 7 carries a constant 1.0 (folds b1 into w1)
HIDDEN = 128
OUT_DIM = 1
W4_PAD_ROWS = 8     # final-layer weight padded to 8 sublanes for a clean MXU shape


def _mlp_kernel(x_ref, w1_ref, w2_ref, b2_ref, w3_ref, b3_ref, w4_ref, b4_ref, o_ref):
    # x_ref: (8, block_n) f32, feature-major (lane-dense); row 7 == 1.0 for real samples.
    x = x_ref[...]

    # Layer 1 (K=8, kept f32 for accuracy of the raw physical features); b1 folded into column 7.
    h = jnp.dot(w1_ref[...], x, preferred_element_type=jnp.float32)          # (128, block_n)
    h = jnp.maximum(h, 0.0).astype(jnp.bfloat16)

    # Layers 2-3: bf16 MXU operands, f32 accumulation; biases are (128, 1) lane-broadcasts.
    h = jnp.dot(w2_ref[...], h, preferred_element_type=jnp.float32) + b2_ref[...]
    h = jnp.maximum(h, 0.0).astype(jnp.bfloat16)

    h = jnp.dot(w3_ref[...], h, preferred_element_type=jnp.float32) + b3_ref[...]
    h = jnp.maximum(h, 0.0).astype(jnp.bfloat16)

    # Layer 4: (8,128) @ (128, block_n) -> (8, block_n); only row 0 carries real weights.
    z_full = jnp.dot(w4_ref[...], h, preferred_element_type=jnp.float32)
    z = z_full[0:1, :] + b4_ref[...]                                         # (1, block_n)

    # Sigmoid via EUP (exp + approx reciprocal) instead of a VPU divide.
    o_ref[...] = pl.reciprocal(1.0 + jnp.exp(-z), approx=True).astype(o_ref.dtype)


def _choose_block_n(n: int) -> int:
    """Adaptive batch tile: big enough to amortize per-step overhead, >= 2 grid steps when
    there is enough work (v7x megacore), capped at 4096 rows, limited padding waste."""
    units = -(-n // 512)                     # cdiv(n, 512)
    if units <= 1:
        return 512
    return 512 * min(8, -(-units // 2))      # cap at 4096, aim for >= 2 steps


@jax.jit
def amplitude_net_pallas(x, params):
    """x: (N, 7) float32; params: torch-oriented (out, in) weights / (out,) biases.
    Returns (N, 1) float32."""
    n, in_dim = x.shape
    assert in_dim == IN_DIM
    block_n = _choose_block_n(n)
    n_pad = -(-n // block_n) * block_n

    # Feature-major, lane-dense input: (8, n_pad). Row 7 = 1.0 (bias fold for layer 1);
    # padded batch columns are all-zero and their (garbage) outputs are sliced off below.
    x_aug = jnp.concatenate([x, jnp.ones((n, 1), x.dtype)], axis=1)          # (n, 8)
    x_fm = jnp.pad(x_aug, ((0, n_pad - n), (0, 0))).T                        # (8, n_pad)

    # Weights stay in PyTorch (out, in) orientation -> every layer is MXU-native (M,K)x(K,N).
    w1_aug = jnp.concatenate(
        [params["w1"], params["b1"][:, None]], axis=1).astype(jnp.float32)   # (128, 8)   f32
    w2b = params["w2"].astype(jnp.bfloat16)                                  # (128, 128) bf16
    w3b = params["w3"].astype(jnp.bfloat16)                                  # (128, 128) bf16
    w4p = jnp.pad(params["w4"],
                  ((0, W4_PAD_ROWS - OUT_DIM), (0, 0))).astype(jnp.bfloat16) # (8, 128)   bf16
    b2c = params["b2"].reshape(HIDDEN, 1).astype(jnp.float32)
    b3c = params["b3"].reshape(HIDDEN, 1).astype(jnp.float32)
    b4c = params["b4"].reshape(1, 1).astype(jnp.float32)

    resident = lambda shape: pl.BlockSpec(shape, lambda i: (0, 0))

    # Footprint: double-buffered x/out tiles + ~90 KiB resident weights + f32/bf16 activations.
    vmem_limit = int(min(64 * 1024 * 1024, 16 * 1024 * 1024 + block_n * HIDDEN * 24))

    out_row = pl.pallas_call(
        _mlp_kernel,
        out_shape=jax.ShapeDtypeStruct((1, n_pad), jnp.float32),
        grid_spec=pltpu.PrefetchScalarGridSpec(
            num_scalar_prefetch=0,
            grid=(n_pad // block_n,),
            in_specs=[
                pl.BlockSpec((AUG_IN, block_n), lambda i: (0, i)),   # lane-dense x tile
                resident(w1_aug.shape),
                resident(w2b.shape), resident(b2c.shape),
                resident(w3b.shape), resident(b3c.shape),
                resident(w4p.shape), resident(b4c.shape),
            ],
            out_specs=pl.BlockSpec((1, block_n), lambda i: (0, i)),  # lane-dense output row
        ),
        compiler_params=pltpu.CompilerParams(
            dimension_semantics=("parallel",),
            vmem_limit_bytes=vmem_limit),
    )(x_fm, w1_aug, w2b, b2c, w3b, b3c, w4p, b4c)

    return out_row[0, :n].reshape(n, OUT_DIM)


def init_params(key):
    """Deterministic init matching AmplitudeNet.__init__ (PyTorch (out, in) weight layout)."""
    dims = [IN_DIM, HIDDEN, HIDDEN, HIDDEN, OUT_DIM]
    params = {}
    for li in range(4):
        fan_in, fan_out = dims[li], dims[li + 1]
        key, kw, kb = jax.random.split(key, 3)
        bound = 1.0 / jnp.sqrt(fan_in)  # PyTorch nn.Linear default uniform bound
        params[f"w{li + 1}"] = jax.random.uniform(
            kw, (fan_out, fan_in), jnp.float32, -bound, bound)
        params[f"b{li + 1}"] = jax.random.uniform(
            kb, (fan_out,), jnp.float32, -bound, bound)
    return params


def reference_forward(x, params):
    h = x
    for li in range(1, 4):
        h = jnp.maximum(h @ params[f"w{li}"].T + params[f"b{li}"], 0.0)
    z = h @ params["w4"].T + params["b4"]
    return jax.nn.sigmoid(z)


if __name__ == "__main__":
    key = jax.random.PRNGKey(0)
    kp, kx = jax.random.split(key)

    params = init_params(kp)
    # 7 normalized physical inputs per sample: [t, m1, m2, chi1z, chi2z, incl, ecc].
    # N=600 is deliberately not a multiple of 512: exercises padding and gives a 2-step grid
    # (block_n=512), which also checks the v7x megacore path.
    N = 600
    x = jax.random.uniform(kx, (N, IN_DIM), jnp.float32)

    out = jax.block_until_ready(amplitude_net_pallas(x, params))
    ref = reference_forward(x, params)

    assert out.shape == (N, OUT_DIM), out.shape
    max_err = float(jnp.max(jnp.abs(out - ref)))
    # Hidden layers in bf16 (f32 accumulation) + approx reciprocal in the sigmoid.
    assert max_err < 2e-2, max_err
    print("KERNEL_OK")
</pallas_src>

<mosaic_0001>
module attributes {stable_mosaic.version = 11 : i64} {
  func.func @_mlp_kernel(%arg0: i32, %arg1: memref<8x512xf32, #tpu.memory_space<vmem>>, %arg2: memref<128x8xf32, #tpu.memory_space<vmem>>, %arg3: memref<128x128xbf16, #tpu.memory_space<vmem>>, %arg4: memref<128x1xf32, #tpu.memory_space<vmem>>, %arg5: memref<128x128xbf16, #tpu.memory_space<vmem>>, %arg6: memref<128x1xf32, #tpu.memory_space<vmem>>, %arg7: memref<8x128xbf16, #tpu.memory_space<vmem>>, %arg8: memref<1x1xf32, #tpu.memory_space<vmem>>, %arg9: memref<1x512xf32, #tpu.memory_space<vmem>>) attributes {dimension_semantics = [#tpu.dimension_semantics<parallel>], iteration_bounds = array<i64: 2>, scalar_prefetch = 0 : i64, scratch_operands = 0 : i64, tpu.core_type = #tpu.core_type<tc>, window_params = [{transform_indices = @transform_0, window_bounds = array<i64: 8, 512>}, {pipeline_mode = #tpu.pipeline_mode<synchronous>, transform_indices = @transform_1, window_bounds = array<i64: 128, 8>}, {pipeline_mode = #tpu.pipeline_mode<synchronous>, transform_indices = @transform_2, window_bounds = array<i64: 128, 128>}, {pipeline_mode = #tpu.pipeline_mode<synchronous>, transform_indices = @transform_3, window_bounds = array<i64: 128, 1>}, {pipeline_mode = #tpu.pipeline_mode<synchronous>, transform_indices = @transform_4, window_bounds = array<i64: 128, 128>}, {pipeline_mode = #tpu.pipeline_mode<synchronous>, transform_indices = @transform_5, window_bounds = array<i64: 128, 1>}, {pipeline_mode = #tpu.pipeline_mode<synchronous>, transform_indices = @transform_6, window_bounds = array<i64: 8, 128>}, {pipeline_mode = #tpu.pipeline_mode<synchronous>, transform_indices = @transform_7, window_bounds = array<i64: 1, 1>}, {transform_indices = @transform_8, window_bounds = array<i64: 1, 512>}]} {
    %c0 = arith.constant 0 : index
    %c0_0 = arith.constant 0 : index
    %0 = vector.load %arg1[%c0, %c0_0] : memref<8x512xf32, #tpu.memory_space<vmem>>, vector<8x512xf32>
    %c0_1 = arith.constant 0 : index
    %c0_2 = arith.constant 0 : index
    %1 = vector.load %arg2[%c0_1, %c0_2] : memref<128x8xf32, #tpu.memory_space<vmem>>, vector<128x8xf32>
    %cst = arith.constant dense<0.000000e+00> : vector<128x512xf32>
    %2 = tpu.matmul %1, %0, %cst {dimension_numbers = #tpu.dot_dimension_numbers<[1], [0], [0], [1], [0, 0, 1, 1], [], []>} : vector<128x8xf32>, vector<8x512xf32>, vector<128x512xf32> -> vector<128x512xf32>
    %cst_3 = arith.constant 0.000000e+00 : f32
    %3 = vector.broadcast %cst_3 : f32 to vector<128x512xf32>
    %4 = arith.maximumf %2, %3 : vector<128x512xf32>
    %5 = arith.truncf %4 : vector<128x512xf32> to vector<128x512xbf16>
    %c0_4 = arith.constant 0 : index
    %c0_5 = arith.constant 0 : index
    %6 = vector.load %arg3[%c0_4, %c0_5] : memref<128x128xbf16, #tpu.memory_space<vmem>>, vector<128x128xbf16>
    %cst_6 = arith.constant dense<0.000000e+00> : vector<128x512xf32>
    %7 = tpu.matmul %6, %5, %cst_6 {dimension_numbers = #tpu.dot_dimension_numbers<[1], [0], [0], [1], [0, 0, 1, 1], [], []>} : vector<128x128xbf16>, vector<128x512xbf16>, vector<128x512xf32> -> vector<128x512xf32>
    %c0_7 = arith.constant 0 : index
    %c0_8 = arith.constant 0 : index
    %8 = vector.load %arg4[%c0_7, %c0_8] : memref<128x1xf32, #tpu.memory_space<vmem>>, vector<128x1xf32>
    %9 = vector.broadcast %8 : vector<128x1xf32> to vector<128x512xf32>
    %10 = arith.addf %7, %9 : vector<128x512xf32>
    %cst_9 = arith.constant 0.000000e+00 : f32
    %11 = vector.broadcast %cst_9 : f32 to vector<128x512xf32>
    %12 = arith.maximumf %10, %11 : vector<128x512xf32>
    %13 = arith.truncf %12 : vector<128x512xf32> to vector<128x512xbf16>
    %c0_10 = arith.constant 0 : index
    %c0_11 = arith.constant 0 : index
    %14 = vector.load %arg5[%c0_10, %c0_11] : memref<128x128xbf16, #tpu.memory_space<vmem>>, vector<128x128xbf16>
    %cst_12 = arith.constant dense<0.000000e+00> : vector<128x512xf32>
    %15 = tpu.matmul %14, %13, %cst_12 {dimension_numbers = #tpu.dot_dimension_numbers<[1], [0], [0], [1], [0, 0, 1, 1], [], []>} : vector<128x128xbf16>, vector<128x512xbf16>, vector<128x512xf32> -> vector<128x512xf32>
    %c0_13 = arith.constant 0 : index
    %c0_14 = arith.constant 0 : index
    %16 = vector.load %arg6[%c0_13, %c0_14] : memref<128x1xf32, #tpu.memory_space<vmem>>, vector<128x1xf32>
    %17 = vector.broadcast %16 : vector<128x1xf32> to vector<128x512xf32>
    %18 = arith.addf %15, %17 : vector<128x512xf32>
    %cst_15 = arith.constant 0.000000e+00 : f32
    %19 = vector.broadcast %cst_15 : f32 to vector<128x512xf32>
    %20 = arith.maximumf %18, %19 : vector<128x512xf32>
    %21 = arith.truncf %20 : vector<128x512xf32> to vector<128x512xbf16>
    %c0_16 = arith.constant 0 : index
    %c0_17 = arith.constant 0 : index
    %22 = vector.load %arg7[%c0_16, %c0_17] : memref<8x128xbf16, #tpu.memory_space<vmem>>, vector<8x128xbf16>
    %cst_18 = arith.constant dense<0.000000e+00> : vector<8x512xf32>
    %23 = tpu.matmul %22, %21, %cst_18 {dimension_numbers = #tpu.dot_dimension_numbers<[1], [0], [0], [1], [0, 0, 1, 1], [], []>} : vector<8x128xbf16>, vector<128x512xbf16>, vector<8x512xf32> -> vector<8x512xf32>
    %24 = vector.extract_strided_slice %23 {offsets = [0, 0], sizes = [1, 512], strides = [1, 1]} : vector<8x512xf32> to vector<1x512xf32>
    %c0_19 = arith.constant 0 : index
    %c0_20 = arith.constant 0 : index
    %25 = vector.load %arg8[%c0_19, %c0_20] : memref<1x1xf32, #tpu.memory_space<vmem>>, vector<1x1xf32>
    %26 = vector.broadcast %25 : vector<1x1xf32> to vector<1x512xf32>
    %27 = arith.addf %24, %26 : vector<1x512xf32>
    %cst_21 = arith.constant 0.000000e+00 : f32
    %28 = vector.broadcast %cst_21 : f32 to vector<1x512xf32>
    %29 = arith.subf %28, %27 : vector<1x512xf32>
    %30 = math.exp %29 : vector<1x512xf32>
    %cst_22 = arith.constant 1.000000e+00 : f32
    %31 = vector.broadcast %cst_22 : f32 to vector<1x512xf32>
    %32 = arith.addf %31, %30 : vector<1x512xf32>
    %33 = tpu.reciprocal %32 {approx = true} : vector<1x512xf32> -> vector<1x512xf32>
    %c0_23 = arith.constant 0 : index
    %c0_24 = arith.constant 0 : index
    %34 = vector.load %arg9[%c0_23, %c0_24] : memref<1x512xf32, #tpu.memory_space<vmem>>, vector<1x512xf32>
    tpu.vector_store %arg9[%c0_23, %c0_24], %33 {strides = array<i32>} : memref<1x512xf32, #tpu.memory_space<vmem>>, vector<1x512xf32>,
    return
  }
  func.func @transform_0(%arg0: i32) -> (i32, i32) {
    %c0_i32 = arith.constant 0 : i32
    %c0_i32_0 = arith.constant 0 : i32
    return %c0_i32, %arg0 : i32, i32
  }
  func.func @transform_1(%arg0: i32) -> (i32, i32) {
    %c0_i32 = arith.constant 0 : i32
    %c0_i32_0 = arith.constant 0 : i32
    %c0_i32_1 = arith.constant 0 : i32
    return %c0_i32, %c0_i32_0 : i32, i32
  }
  func.func @transform_2(%arg0: i32) -> (i32, i32) {
    %c0_i32 = arith.constant 0 : i32
    %c0_i32_0 = arith.constant 0 : i32
    %c0_i32_1 = arith.constant 0 : i32
    return %c0_i32, %c0_i32_0 : i32, i32
  }
  func.func @transform_3(%arg0: i32) -> (i32, i32) {
    %c0_i32 = arith.constant 0 : i32
    %c0_i32_0 = arith.constant 0 : i32
    %c0_i32_1 = arith.constant 0 : i32
    return %c0_i32, %c0_i32_0 : i32, i32
  }
  func.func @transform_4(%arg0: i32) -> (i32, i32) {
    %c0_i32 = arith.constant 0 : i32
    %c0_i32_0 = arith.constant 0 : i32
    %c0_i32_1 = arith.constant 0 : i32
    return %c0_i32, %c0_i32_0 : i32, i32
  }
  func.func @transform_5(%arg0: i32) -> (i32, i32) {
    %c0_i32 = arith.constant 0 : i32
    %c0_i32_0 = arith.constant 0 : i32
    %c0_i32_1 = arith.constant 0 : i32
    return %c0_i32, %c0_i32_0 : i32, i32
  }
  func.func @transform_6(%arg0: i32) -> (i32, i32) {
    %c0_i32 = arith.constant 0 : i32
    %c0_i32_0 = arith.constant 0 : i32
    %c0_i32_1 = arith.constant 0 : i32
    return %c0_i32, %c0_i32_0 : i32, i32
  }
  func.func @transform_7(%arg0: i32) -> (i32, i32) {
    %c0_i32 = arith.constant 0 : i32
    %c0_i32_0 = arith.constant 0 : i32
    %c0_i32_1 = arith.constant 0 : i32
    return %c0_i32, %c0_i32_0 : i32, i32
  }
  func.func @transform_8(%arg0: i32) -> (i32, i32) {
    %c0_i32 = arith.constant 0 : i32
    %c0_i32_0 = arith.constant 0 : i32
    return %c0_i32, %arg0 : i32, i32
  }
}

</mosaic_0001>

<llo_original>
// kernel: amplitude_net_pallas.1
$region0: #{amplitude_net_pallas.1}
  #allocation0 [shape = 'u32[]', space=smem, size = 0x4, offset = 0x4, fixed_abs, tag = 'smem constant byte address 0x4 - core index']
  #allocation1 [shape = 'u32[144,128]{1,0:T(1,128)}', space=vmem, size = 0x12000, scoped, tag = 'internal scratch']
  #allocation2 [shape = 'f32[1,1]{1,0:T(1,128)S(1)}', space=vmem, size = 0x200, scoped, tag = 'scoped memory for amplitude_net_pallas.1']
  %s0 = inlined_call_operand.vmem [shape: f32[8,1024], index: 0, kind: input, shape index: {}]
  %s1 = inlined_call_operand.vmem [shape: f32[128,8], index: 1, kind: input, shape index: {}]
  %s2 = inlined_call_operand.vmem [shape: bf16[128,128], index: 2, kind: input, shape index: {}]
  %s3 = inlined_call_operand.vmem [shape: f32[128,1], index: 3, kind: input, shape index: {}]
  %s4 = inlined_call_operand.vmem [shape: bf16[128,128], index: 4, kind: input, shape index: {}]
  %s5 = inlined_call_operand.vmem [shape: f32[128,1], index: 5, kind: input, shape index: {}]
  %s6 = inlined_call_operand.vmem [shape: bf16[8,128], index: 6, kind: input, shape index: {}]
  %s7 = inlined_call_operand.<no memory space> [shape: f32[1,1], index: 7, kind: input, shape index: {}]
  %s8 = inlined_call_operand.vmem [shape: f32[1,1024], index: 8, kind: output, shape index: {}]
  %s9 = sld [smem:[#allocation0]]
  $region65: #{amplitude_net_pallas.1} parent=0
    _
  %s11 = ssub.s32 1, %s9
  %s12 = scalar_select 0, %s11, %s9
  %v13 = vstv %s7
  %14 = vst [vmem:[#allocation2] sm:$0x1] %v13
  loop: start=0, step=1, limit=4
  $region2: #{amplitude_net_pallas.1} parent=0 // loop_pre_header
    _
  $region3: #{amplitude_net_pallas.1} parent=0 // loop_header
    %s16 = sphi 0, %s20
    %p17 = scmp.ge.s32.totalorder %s16, 4
    %s26 = sphi 0, %s28
    %s29 = sphi 0, %s26
    %s30 = sphi 0, %s29
    %s46 = sphi 0, %s30
    %s50 = sphi 0, %s50
    %s52 = sphi 0, %s50
    %s53 = sphi 0, %s52
    %s67 = sphi 0, %s53
    %s71 = sphi 0, %s71
    %s73 = sphi 0, %s71
    %s74 = sphi 0, %s73
    %s88 = sphi 0, %s74
    %s92 = sphi 0, %s92
    %s94 = sphi 0, %s92
    %s95 = sphi 0, %s94
    %s109 = sphi 0, %s95
    %s113 = sphi 0, %s113
    %s115 = sphi 0, %s113
    %s116 = sphi 0, %s115
    %s130 = sphi 0, %s116
    %s134 = sphi 0, %s134
    %s136 = sphi 0, %s134
    %s137 = sphi 0, %s136
    %s151 = sphi 0, %s137
    %s155 = sphi 0, %s155
    %s157 = sphi 0, %s155
    %s158 = sphi 0, %s157
    %s172 = sphi 0, %s158
    %s176 = sphi 0, %s176
    %s178 = sphi 0, %s176
    %s179 = sphi 0, %s178
    %s193 = sphi 0, %s179
    %s199 = sphi 0, %s201
    %s202 = sphi 0, %s199
    %s203 = sphi 0, %s202
    %s219 = sphi 0, %s203
  $region4: #{amplitude_net_pallas.1} parent=0 // loop_header_branch
    %19 = sbr.rel (%p17) target = $region8
  $region5: #{amplitude_net_pallas.1} parent=0 // loop_body
    %s21 = ssub.s32 %s16, 1
    %s22 = ssub.s32 %s16, 2
    %s23 = sadd.s32 %s16, 1
    %s24 = ssub.s32 %s16, %s23
    %p25 = scmp.eq.s32.totalorder %s24, 0
    %s27 = sadd.s32 %s26, 1
    %s28 = scalar_select %p25, %s26, %s27
    %p31 = pneg %p25
    %p32 = scmp.eq.s32.totalorder %s16, 1
    %p33 = por %p31, %p32
    %p34 = scmp.ne.s32.totalorder %s26, %s29
    %p35 = scmp.eq.s32.totalorder %s16, 0
    %p36 = por %p34, %p35
    %p37 = scmp.ne.s32.totalorder %s26, %s29
    %p38 = scmp.eq.s32.totalorder %s21, 1
    %p39 = por %p37, %p38
    %p40 = scmp.ne.s32.totalorder %s29, %s30
    %p41 = scmp.eq.s32.totalorder %s21, 0
    %p42 = por %p40, %p41
    %p43 = scmp.ne.s32.totalorder %s29, %s30
    %p44 = scmp.eq.s32.totalorder %s22, 1
    %p45 = por %p43, %p44
    %p47 = scmp.ne.s32.totalorder %s30, %s46
    %p48 = scmp.eq.s32.totalorder %s22, 0
    %p49 = por %p47, %p48
    %s51 = sadd.s32 %s50, 1
    %p54 = scmp.eq.s32.totalorder %s16, 1
    %p55 = scmp.ne.s32.totalorder %s50, %s52
    %p56 = scmp.eq.s32.totalorder %s16, 0
    %p57 = por %p55, %p56
    %p58 = scmp.ne.s32.totalorder %s50, %s52
    %p59 = scmp.eq.s32.totalorder %s21, 1
    %p60 = por %p58, %p59
    %p61 = scmp.ne.s32.totalorder %s52, %s53
    %p62 = scmp.eq.s32.totalorder %s21, 0
    %p63 = por %p61, %p62
    %p64 = scmp.ne.s32.totalorder %s52, %s53
    %p65 = scmp.eq.s32.totalorder %s22, 1
    %p66 = por %p64, %p65
    %p68 = scmp.ne.s32.totalorder %s53, %s67
    %p69 = scmp.eq.s32.totalorder %s22, 0
    %p70 = por %p68, %p69
    %s72 = sadd.s32 %s71, 1
    %p75 = scmp.eq.s32.totalorder %s16, 1
    %p76 = scmp.ne.s32.totalorder %s71, %s73
    %p77 = scmp.eq.s32.totalorder %s16, 0
    %p78 = por %p76, %p77
    %p79 = scmp.ne.s32.totalorder %s71, %s73
    %p80 = scmp.eq.s32.totalorder %s21, 1
    %p81 = por %p79, %p80
    %p82 = scmp.ne.s32.totalorder %s73, %s74
    %p83 = scmp.eq.s32.totalorder %s21, 0
    %p84 = por %p82, %p83
    %p85 = scmp.ne.s32.totalorder %s73, %s74
    %p86 = scmp.eq.s32.totalorder %s22, 1
    %p87 = por %p85, %p86
    %p89 = scmp.ne.s32.totalorder %s74, %s88
    %p90 = scmp.eq.s32.totalorder %s22, 0
    %p91 = por %p89, %p90
    %s93 = sadd.s32 %s92, 1
    %p96 = scmp.eq.s32.totalorder %s16, 1
    %p97 = scmp.ne.s32.totalorder %s92, %s94
    %p98 = scmp.eq.s32.totalorder %s16, 0
    %p99 = por %p97, %p98
    %p100 = scmp.ne.s32.totalorder %s92, %s94
    %p101 = scmp.eq.s32.totalorder %s21, 1
    %p102 = por %p100, %p101
    %p103 = scmp.ne.s32.totalorder %s94, %s95
    %p104 = scmp.eq.s32.totalorder %s21, 0
    %p105 = por %p103, %p104
    %p106 = scmp.ne.s32.totalorder %s94, %s95
    %p107 = scmp.eq.s32.totalorder %s22, 1
    %p108 = por %p106, %p107
    %p110 = scmp.ne.s32.totalorder %s95, %s109
    %p111 = scmp.eq.s32.totalorder %s22, 0
    %p112 = por %p110, %p111
    %s114 = sadd.s32 %s113, 1
    %p117 = scmp.eq.s32.totalorder %s16, 1
    %p118 = scmp.ne.s32.totalorder %s113, %s115
    %p119 = scmp.eq.s32.totalorder %s16, 0
    %p120 = por %p118, %p119
    %p121 = scmp.ne.s32.totalorder %s113, %s115
    %p122 = scmp.eq.s32.totalorder %s21, 1
    %p123 = por %p121, %p122
    %p124 = scmp.ne.s32.totalorder %s115, %s116
    %p125 = scmp.eq.s32.totalorder %s21, 0
    %p126 = por %p124, %p125
    %p127 = scmp.ne.s32.totalorder %s115, %s116
    %p128 = scmp.eq.s32.totalorder %s22, 1
    %p129 = por %p127, %p128
    %p131 = scmp.ne.s32.totalorder %s116, %s130
    %p132 = scmp.eq.s32.totalorder %s22, 0
    %p133 = por %p131, %p132
    %s135 = sadd.s32 %s134, 1
    %p138 = scmp.eq.s32.totalorder %s16, 1
    %p139 = scmp.ne.s32.totalorder %s134, %s136
    %p140 = scmp.eq.s32.totalorder %s16, 0
    %p141 = por %p139, %p140
    %p142 = scmp.ne.s32.totalorder %s134, %s136
    %p143 = scmp.eq.s32.totalorder %s21, 1
    %p144 = por %p142, %p143
    %p145 = scmp.ne.s32.totalorder %s136, %s137
    %p146 = scmp.eq.s32.totalorder %s21, 0
    %p147 = por %p145, %p146
    %p148 = scmp.ne.s32.totalorder %s136, %s137
    %p149 = scmp.eq.s32.totalorder %s22, 1
    %p150 = por %p148, %p149
    %p152 = scmp.ne.s32.totalorder %s137, %s151
    %p153 = scmp.eq.s32.totalorder %s22, 0
    %p154 = por %p152, %p153
    %s156 = sadd.s32 %s155, 1
    %p159 = scmp.eq.s32.totalorder %s16, 1
    %p160 = scmp.ne.s32.totalorder %s155, %s157
    %p161 = scmp.eq.s32.totalorder %s16, 0
    %p162 = por %p160, %p161
    %p163 = scmp.ne.s32.totalorder %s155, %s157
    %p164 = scmp.eq.s32.totalorder %s21, 1
    %p165 = por %p163, %p164
    %p166 = scmp.ne.s32.totalorder %s157, %s158
    %p167 = scmp.eq.s32.totalorder %s21, 0
    %p168 = por %p166, %p167
    %p169 = scmp.ne.s32.totalorder %s157, %s158
    %p170 = scmp.eq.s32.totalorder %s22, 1
    %p171 = por %p169, %p170
    %p173 = scmp.ne.s32.totalorder %s158, %s172
    %p174 = scmp.eq.s32.totalorder %s22, 0
    %p175 = por %p173, %p174
    %s177 = sadd.s32 %s176, 1
    %p180 = scmp.eq.s32.totalorder %s16, 1
    %p181 = scmp.ne.s32.totalorder %s176, %s178
    %p182 = scmp.eq.s32.totalorder %s16, 0
    %p183 = por %p181, %p182
    %p184 = scmp.ne.s32.totalorder %s176, %s178
    %p185 = scmp.eq.s32.totalorder %s21, 1
    %p186 = por %p184, %p185
    %p187 = scmp.ne.s32.totalorder %s178, %s179
    %p188 = scmp.eq.s32.totalorder %s21, 0
    %p189 = por %p187, %p188
    %p190 = scmp.ne.s32.totalorder %s178, %s179
    %p191 = scmp.eq.s32.totalorder %s22, 1
    %p192 = por %p190, %p191
    %p194 = scmp.ne.s32.totalorder %s179, %s193
    %p195 = scmp.eq.s32.totalorder %s22, 0
    %p196 = por %p194, %p195
    %s197 = ssub.s32 %s16, %s23
    %p198 = scmp.eq.s32.totalorder %s197, 0
    %s200 = sadd.s32 %s199, 1
    %s201 = scalar_select %p198, %s199, %s200
    %p204 = pneg %p198
    %p205 = scmp.eq.s32.totalorder %s16, 1
    %p206 = por %p204, %p205
    %p207 = scmp.ne.s32.totalorder %s199, %s202
    %p208 = scmp.eq.s32.totalorder %s16, 0
    %p209 = por %p207, %p208
    %p210 = scmp.ne.s32.totalorder %s199, %s202
    %p211 = scmp.eq.s32.totalorder %s21, 1
    %p212 = por %p210, %p211
    %p213 = scmp.ne.s32.totalorder %s202, %s203
    %p214 = scmp.eq.s32.totalorder %s21, 0
    %p215 = por %p213, %p214
    %p216 = scmp.ne.s32.totalorder %s202, %s203
    %p217 = scmp.eq.s32.totalorder %s22, 1
    %p218 = por %p216, %p217
    %p220 = scmp.ne.s32.totalorder %s203, %s219
    %p221 = scmp.eq.s32.totalorder %s22, 0
    %p222 = por %p220, %p221
    %p223 = scmp.le.s32.totalorder 1, %s16
    %p224 = scmp.lt.s32.totalorder %s16, 3
    %p225 = pnand %p223, %p224
    %p226 = pneg %p225
    // Predicated region
    $region9: #{amplitude_net_pallas.1} parent=5 // pred_check
      _
    $region10: #{amplitude_net_pallas.1} parent=5 // pred_check_branch
      %228 = sbr.rel (%p225) target = $region12
    $region11: #{amplitude_net_pallas.1} parent=5 // pred_region
      %s229 = ssub.s32 %s16, 1
      // Predicated region
      $region13: #{amplitude_net_pallas.1} parent=11 // pred_check
        %p230 = pneg %p63
      $region14: #{amplitude_net_pallas.1} parent=11 // pred_check_branch
        %232 = sbr.rel (%p230) target = $region16
      $region15: #{amplitude_net_pallas.1} parent=11 // pred_region
        _
      $region16: #{amplitude_net_pallas.1} parent=11 // pred_fallthru
        _
      // Predicated region
      $region17: #{amplitude_net_pallas.1} parent=11 // pred_check
        %p233 = pneg %p84
      $region18: #{amplitude_net_pallas.1} parent=11 // pred_check_branch
        %235 = sbr.rel (%p233) target = $region20
      $region19: #{amplitude_net_pallas.1} parent=11 // pred_region
        _
      $region20: #{amplitude_net_pallas.1} parent=11 // pred_fallthru
        _
      // Predicated region
      $region21: #{amplitude_net_pallas.1} parent=11 // pred_check
        %p236 = pneg %p105
      $region22: #{amplitude_net_pallas.1} parent=11 // pred_check_branch
        %238 = sbr.rel (%p236) target = $region24
      $region23: #{amplitude_net_pallas.1} parent=11 // pred_region
        _
      $region24: #{amplitude_net_pallas.1} parent=11 // pred_fallthru
        _
      // Predicated region
      $region25: #{amplitude_net_pallas.1} parent=11 // pred_check
        %p239 = pneg %p126
      $region26: #{amplitude_net_pallas.1} parent=11 // pred_check_branch
        %241 = sbr.rel (%p239) target = $region28
      $region27: #{amplitude_net_pallas.1} parent=11 // pred_region
        _
      $region28: #{amplitude_net_pallas.1} parent=11 // pred_fallthru
        _
      // Predicated region
      $region29: #{amplitude_net_pallas.1} parent=11 // pred_check
        %p242 = pneg %p147
      $region30: #{amplitude_net_pallas.1} parent=11 // pred_check_branch
        %244 = sbr.rel (%p242) target = $region32
      $region31: #{amplitude_net_pallas.1} parent=11 // pred_region
        _
      $region32: #{amplitude_net_pallas.1} parent=11 // pred_fallthru
        _
      // Predicated region
      $region33: #{amplitude_net_pallas.1} parent=11 // pred_check
        %p245 = pneg %p168
      $region34: #{amplitude_net_pallas.1} parent=11 // pred_check_branch
        %247 = sbr.rel (%p245) target = $region36
      $region35: #{amplitude_net_pallas.1} parent=11 // pred_region
        _
      $region36: #{amplitude_net_pallas.1} parent=11 // pred_fallthru
        _
      // Predicated region
      $region37: #{amplitude_net_pallas.1} parent=11 // pred_check
        %p248 = pneg %p189
      $region38: #{amplitude_net_pallas.1} parent=11 // pred_check_branch
        %250 = sbr.rel (%p248) target = $region40
      $region39: #{amplitude_net_pallas.1} parent=11 // pred_region
        _
      $region40: #{amplitude_net_pallas.1} parent=11 // pred_fallthru
        _
    $region12: #{amplitude_net_pallas.1} parent=5 // pred_fallthru
      _
    %p251 = scmp.lt.s32.totalorder %s16, 2
    // Predicated region
    $region41: #{amplitude_net_pallas.1} parent=5 // pred_check
      %p252 = pneg %p251
    $region42: #{amplitude_net_pallas.1} parent=5 // pred_check_branch
      %254 = sbr.rel (%p252) target = $region44
    $region43: #{amplitude_net_pallas.1} parent=5 // pred_region
      // Predicated region
      $region45: #{amplitude_net_pallas.1} parent=43 // pred_check
        %p255 = pneg %p36
      $region46: #{amplitude_net_pallas.1} parent=43 // pred_check_branch
        %257 = sbr.rel (%p255) target = $region48
      $region47: #{amplitude_net_pallas.1} parent=43 // pred_region
        %s258 = smul.u32 4, %s16
        %p259 = scmp.lt.s32.totalorder %s258, 7
        %s260 = scalar_select %p259, %s258, 7
        %s261 = smul.addr %s260, 8
        %s262 = scalar_lea.vmem %s0, %s261
        %s263 = smul.u32 4, %s16
      $region48: #{amplitude_net_pallas.1} parent=43 // pred_fallthru
        _
    $region44: #{amplitude_net_pallas.1} parent=5 // pred_fallthru
      _
    %p264 = scmp.le.s32.totalorder 1, %s16
    %p265 = scmp.lt.s32.totalorder %s16, 3
    %p266 = pnand %p264, %p265
    %p267 = pneg %p266
    // Predicated region
    $region49: #{amplitude_net_pallas.1} parent=5 // pred_check
      _
    $region50: #{amplitude_net_pallas.1} parent=5 // pred_check_branch
      %269 = sbr.rel (%p266) target = $region52
    $region51: #{amplitude_net_pallas.1} parent=5 // pred_region
      %s270 = ssub.s32 %s16, 1
      %s271 = smul.u32 4, %s21
      %p272 = scmp.lt.s32.totalorder %s271, 7
      %s273 = scalar_select %p272, %s271, 7
      %s274 = smul.addr %s273, 8
      %s275 = scalar_lea.vmem %s0, %s274
      %p276 = pneg %p42
      %p277 = pneg %p39
      %p278 = pneg %p63
      %p279 = pneg %p60
      %p280 = pneg %p84
      %p281 = pneg %p81
      %p282 = pneg %p105
      %p283 = pneg %p102
      %p284 = pneg %p126
      %p285 = pneg %p123
      %p286 = pneg %p147
      %p287 = pneg %p144
      %p288 = pneg %p168
      %p289 = pneg %p165
      %p290 = pneg %p189
      %p291 = pneg %p186
      %p292 = pneg %p215
      %p293 = pneg %p212
      %s294 = smul.u32 4, %s21
      %p295 = scmp.lt.s32.totalorder %s294, 7
      %s296 = scalar_select %p295, %s294, 7
      %s297 = scalar_lea.vmem %s8, %s296
      %s298 = smul.u32 4, %s21
      %p299 = scmp.lt.s32.totalorder %s298, 7
      %s300 = scalar_select %p299, %s298, 7
      %s301 = smul.addr %s300, 8
      %s302 = scalar_lea.vmem %s0, %s301
      %s303 = smul.u32 4, %s21
      %s304 = smul.u32 4, %s21
      %p305 = scmp.lt.s32.totalorder %s304, 7
      %s306 = scalar_select %p305, %s304, 7
      %s307 = scalar_lea.vmem %s8, %s306
      %s308 = smul.u32 4, %s21
      %v310 = vld [vmem:[%s302] sm:$0xff]
      %v311 = vld [vmem:[%s302 + $0x8] sm:$0xff]
      %v312 = vld [vmem:[%s302 + $0x10] sm:$0xff]
      %v313 = vld [vmem:[%s302 + $0x18] sm:$0xff]
      %v314 = vld [vmem:[%s1] sm:$0xff]
      %v315 = vld [vmem:[%s1 + $0x8] sm:$0xff]
      %v316 = vld [vmem:[%s1 + $0x10] sm:$0xff]
      %v317 = vld [vmem:[%s1 + $0x18] sm:$0xff]
      %v318 = vld [vmem:[%s1 + $0x20] sm:$0xff]
      %v319 = vld [vmem:[%s1 + $0x28] sm:$0xff]
      %v320 = vld [vmem:[%s1 + $0x30] sm:$0xff]
      %v321 = vld [vmem:[%s1 + $0x38] sm:$0xff]
      %v322 = vld [vmem:[%s1 + $0x40] sm:$0xff]
      %v323 = vld [vmem:[%s1 + $0x48] sm:$0xff]
      %v324 = vld [vmem:[%s1 + $0x50] sm:$0xff]
      %v325 = vld [vmem:[%s1 + $0x58] sm:$0xff]
      %v326 = vld [vmem:[%s1 + $0x60] sm:$0xff]
      %v327 = vld [vmem:[%s1 + $0x68] sm:$0xff]
      %v328 = vld [vmem:[%s1 + $0x70] sm:$0xff]
      %v329 = vld [vmem:[%s1 + $0x78] sm:$0xff]
      %vm330 = vcmask 64512
      %v332 = vsel %vm330, %v314, 0
      %v335 = vsel %vm330, %v315, 0
      %v338 = vsel %vm330, %v316, 0
      %v341 = vsel %vm330, %v317, 0
      %v344 = vsel %vm330, %v318, 0
      %v347 = vsel %vm330, %v319, 0
      %v350 = vsel %vm330, %v320, 0
      %v353 = vsel %vm330, %v321, 0
      %v356 = vsel %vm330, %v322, 0
      %v359 = vsel %vm330, %v323, 0
      %v362 = vsel %vm330, %v324, 0
      %v365 = vsel %vm330, %v325, 0
      %v368 = vsel %vm330, %v326, 0
      %v371 = vsel %vm330, %v327, 0
      %v374 = vsel %vm330, %v328, 0
      %v377 = vsel %vm330, %v329, 0
      %379 = vmatprep.subr.mxu0 %v311
      %380 = vmatpush1.msra.mxu0 %v310
      %381 = vmatprep.subr.mxu0 0.0
      %382 = vmatpush1.msra.mxu0 0.0
      %383 = vmatprep.subr.mxu0 0.0
      %384 = vmatpush1.msra.mxu0 0.0
      %385 = vmatprep.subr.mxu0 0.0
      %386 = vmatpush1.msra.mxu0 0.0
      %387 = vmatprep.subr.mxu0 0.0
      %388 = vmatpush1.msra.mxu0 0.0
      %389 = vmatprep.subr.mxu0 0.0
      %390 = vmatpush1.msra.mxu0 0.0
      %391 = vmatprep.subr.mxu0 0.0
      %392 = vmatpush1.msra.mxu0 0.0
      %393 = vmatprep.subr.mxu0 0.0
      %394 = vmatpush1.msra.mxu0 0.0
      %395 = vmatprep.subr.mxu0 0.0
      %396 = vmatpush1.msra.mxu0 0.0
      %397 = vmatprep.subr.mxu0 0.0
      %398 = vmatpush1.msra.mxu0 0.0
      %399 = vmatprep.subr.mxu0 0.0
      %400 = vmatpush1.msra.mxu0 0.0
      %401 = vmatprep.subr.mxu0 0.0
      %402 = vmatpush1.msra.mxu0 0.0
      %403 = vmatprep.subr.mxu0 0.0
      %404 = vmatpush1.msra.mxu0 0.0
      %405 = vmatprep.subr.mxu0 0.0
      %406 = vmatpush1.msra.mxu0 0.0
      %407 = vmatprep.subr.mxu0 0.0
      %408 = vmatpush1.msra.mxu0 0.0
      %409 = vmatprep.subr.mxu0 0.0
      %410 = vmatpush1.msra.mxu0 0.0
      %411 = vmatprep.subr.mxu0 0.0
      %412 = vmatpush1.msra.mxu0 0.0
      %413 = vmatprep.subr.mxu0 0.0
      %414 = vmatpush1.msra.mxu0 0.0
      %415 = vmatprep.subr.mxu0 0.0
      %416 = vmatpush1.msra.mxu0 0.0
      %417 = vmatprep.subr.mxu0 0.0
      %418 = vmatpush1.msra.mxu0 0.0
      %419 = vmatprep.subr.mxu0 0.0
      %420 = vmatpush1.msra.mxu0 0.0
      %421 = vmatprep.subr.mxu0 0.0
      %422 = vmatpush1.msra.mxu0 0.0
      %423 = vmatprep.subr.mxu0 0.0
      %424 = vmatpush1.msra.mxu0 0.0
      %425 = vmatprep.subr.mxu0 0.0
      %426 = vmatpush1.msra.mxu0 0.0
      %427 = vmatprep.subr.mxu0 0.0
      %428 = vmatpush1.msra.mxu0 0.0
      %429 = vmatprep.subr.mxu0 0.0
      %430 = vmatpush1.msra.mxu0 0.0
      %431 = vmatprep.subr.mxu0 0.0
      %432 = vmatpush1.msra.mxu0 0.0
      %433 = vmatprep.subr.mxu0 0.0
      %434 = vmatpush1.msra.mxu0 0.0
      %435 = vmatprep.subr.mxu0 0.0
      %436 = vmatpush1.msra.mxu0 0.0
      %437 = vmatprep.subr.mxu0 0.0
      %438 = vmatpush1.msra.mxu0 0.0
      %439 = vmatprep.subr.mxu0 0.0
      %440 = vmatpush1.msra.mxu0 0.0
      %441 = vmatprep.subr.mxu0 0.0
      %442 = vmatpush1.msra.mxu0 0.0
      %443 = vmatprep.mubr.f32.mxu0 0.0
      %444 = vmatmul.mubr.f32.gmra.mrb[0].mxu0 %v332
      %v445 = vpop.f32.mrb[0].mxu0
      %v446 = vadd.f32 0.0, %v445
      %v447 = vpop.f32.mrb[0].mxu0
      %v448 = vadd.f32 0.0, %v447
      %449 = vmatprep.mubr.f32.mxu0 0.0
      %450 = vmatmul.mubr.f32.gmra.mrb[0].mxu0 %v335
      %v451 = vpop.f32.mrb[0].mxu0
      %v452 = vadd.f32 0.0, %v451
      %v453 = vpop.f32.mrb[0].mxu0
      %v454 = vadd.f32 0.0, %v453
      %455 = vmatprep.mubr.f32.mxu0 0.0
      %456 = vmatmul.mubr.f32.gmra.mrb[0].mxu0 %v338
      %v457 = vpop.f32.mrb[0].mxu0
      %v458 = vadd.f32 0.0, %v457
      %v459 = vpop.f32.mrb[0].mxu0
      %v460 = vadd.f32 0.0, %v459
      %461 = vmatprep.mubr.f32.mxu0 0.0
      %462 = vmatmul.mubr.f32.gmra.mrb[0].mxu0 %v341
      %v463 = vpop.f32.mrb[0].mxu0
      %v464 = vadd.f32 0.0, %v463
      %v465 = vpop.f32.mrb[0].mxu0
      %v466 = vadd.f32 0.0, %v465
      %467 = vmatprep.mubr.f32.mxu0 0.0
      %468 = vmatmul.mubr.f32.gmra.mrb[0].mxu0 %v344
      %v469 = vpop.f32.mrb[0].mxu0
      %v470 = vadd.f32 0.0, %v469
      %v471 = vpop.f32.mrb[0].mxu0
      %v472 = vadd.f32 0.0, %v471
      %473 = vmatprep.mubr.f32.mxu0 0.0
      %474 = vmatmul.mubr.f32.gmra.mrb[0].mxu0 %v347
      %v475 = vpop.f32.mrb[0].mxu0
      %v476 = vadd.f32 0.0, %v475
      %v477 = vpop.f32.mrb[0].mxu0
      %v478 = vadd.f32 0.0, %v477
      %479 = vmatprep.mubr.f32.mxu0 0.0
      %480 = vmatmul.mubr.f32.gmra.mrb[0].mxu0 %v350
      %v481 = vpop.f32.mrb[0].mxu0
      %v482 = vadd.f32 0.0, %v481
      %v483 = vpop.f32.mrb[0].mxu0
      %v484 = vadd.f32 0.0, %v483
      %485 = vmatprep.mubr.f32.mxu0 0.0
      %486 = vmatmul.mubr.f32.gmra.mrb[0].mxu0 %v353
      %v487 = vpop.f32.mrb[0].mxu0
      %v488 = vadd.f32 0.0, %v487
      %v489 = vpop.f32.mrb[0].mxu0
      %v490 = vadd.f32 0.0, %v489
      %491 = vmatprep.mubr.f32.mxu0 0.0
      %492 = vmatmul.mubr.f32.gmra.mrb[0].mxu0 %v356
      %v493 = vpop.f32.mrb[0].mxu0
      %v494 = vadd.f32 0.0, %v493
      %v495 = vpop.f32.mrb[0].mxu0
      %v496 = vadd.f32 0.0, %v495
      %497 = vmatprep.mubr.f32.mxu0 0.0
      %498 = vmatmul.mubr.f32.gmra.mrb[0].mxu0 %v359
      %v499 = vpop.f32.mrb[0].mxu0
      %v500 = vadd.f32 0.0, %v499
      %v501 = vpop.f32.mrb[0].mxu0
      %v502 = vadd.f32 0.0, %v501
      %503 = vmatprep.mubr.f32.mxu0 0.0
      %504 = vmatmul.mubr.f32.gmra.mrb[0].mxu0 %v362
      %v505 = vpop.f32.mrb[0].mxu0
      %v506 = vadd.f32 0.0, %v505
      %v507 = vpop.f32.mrb[0].mxu0
      %v508 = vadd.f32 0.0, %v507
      %509 = vmatprep.mubr.f32.mxu0 0.0
      %510 = vmatmul.mubr.f32.gmra.mrb[0].mxu0 %v365
      %v511 = vpop.f32.mrb[0].mxu0
      %v512 = vadd.f32 0.0, %v511
      %v513 = vpop.f32.mrb[0].mxu0
      %v514 = vadd.f32 0.0, %v513
      %515 = vmatprep.mubr.f32.mxu0 0.0
      %516 = vmatmul.mubr.f32.gmra.mrb[0].mxu0 %v368
      %v517 = vpop.f32.mrb[0].mxu0
      %v518 = vadd.f32 0.0, %v517
      %v519 = vpop.f32.mrb[0].mxu0
      %v520 = vadd.f32 0.0, %v519
      %521 = vmatprep.mubr.f32.mxu0 0.0
      %522 = vmatmul.mubr.f32.gmra.mrb[0].mxu0 %v371
      %v523 = vpop.f32.mrb[0].mxu0
      %v524 = vadd.f32 0.0, %v523
      %v525 = vpop.f32.mrb[0].mxu0
      %v526 = vadd.f32 0.0, %v525
      %527 = vmatprep.mubr.f32.mxu0 0.0
      %528 = vmatmul.mubr.f32.gmra.mrb[0].mxu0 %v374
      %v529 = vpop.f32.mrb[0].mxu0
      %v530 = vadd.f32 0.0, %v529
      %v531 = vpop.f32.mrb[0].mxu0
      %v532 = vadd.f32 0.0, %v531
      %533 = vmatprep.mubr.f32.mxu0 0.0
      %534 = vmatmul.mubr.f32.gmra.mrb[0].mxu0 %v377
      %v535 = vpop.f32.mrb[0].mxu0
      %v536 = vadd.f32 0.0, %v535
      %v537 = vpop.f32.mrb[0].mxu0
      %v538 = vadd.f32 0.0, %v537
      %539 = vdwg.mxu0
      %540 = vmatprep.subr.mxu0 %v313
      %541 = vmatpush1.msra.mxu0 %v312
      %542 = vmatprep.subr.mxu0 0.0
      %543 = vmatpush1.msra.mxu0 0.0
      %544 = vmatprep.subr.mxu0 0.0
      %545 = vmatpush1.msra.mxu0 0.0
      %546 = vmatprep.subr.mxu0 0.0
      %547 = vmatpush1.msra.mxu0 0.0
      %548 = vmatprep.subr.mxu0 0.0
      %549 = vmatpush1.msra.mxu0 0.0
      %550 = vmatprep.subr.mxu0 0.0
      %551 = vmatpush1.msra.mxu0 0.0
      %552 = vmatprep.subr.mxu0 0.0
      %553 = vmatpush1.msra.mxu0 0.0
      %554 = vmatprep.subr.mxu0 0.0
      %555 = vmatpush1.msra.mxu0 0.0
      %556 = vmatprep.subr.mxu0 0.0
      %557 = vmatpush1.msra.mxu0 0.0
      %558 = vmatprep.subr.mxu0 0.0
      %559 = vmatpush1.msra.mxu0 0.0
      %560 = vmatprep.subr.mxu0 0.0
      %561 = vmatpush1.msra.mxu0 0.0
      %562 = vmatprep.subr.mxu0 0.0
      %563 = vmatpush1.msra.mxu0 0.0
      %564 = vmatprep.subr.mxu0 0.0
      %565 = vmatpush1.msra.mxu0 0.0
      %566 = vmatprep.subr.mxu0 0.0
      %567 = vmatpush1.msra.mxu0 0.0
      %568 = vmatprep.subr.mxu0 0.0
      %569 = vmatpush1.msra.mxu0 0.0
      %570 = vmatprep.subr.mxu0 0.0
      %571 = vmatpush1.msra.mxu0 0.0
      %572 = vmatprep.subr.mxu0 0.0
      %573 = vmatpush1.msra.mxu0 0.0
      %574 = vmatprep.subr.mxu0 0.0
      %575 = vmatpush1.msra.mxu0 0.0
      %576 = vmatprep.subr.mxu0 0.0
      %577 = vmatpush1.msra.mxu0 0.0
      %578 = vmatprep.subr.mxu0 0.0
      %579 = vmatpush1.msra.mxu0 0.0
      %580 = vmatprep.subr.mxu0 0.0
      %581 = vmatpush1.msra.mxu0 0.0
      %582 = vmatprep.subr.mxu0 0.0
      %583 = vmatpush1.msra.mxu0 0.0
      %584 = vmatprep.subr.mxu0 0.0
      %585 = vmatpush1.msra.mxu0 0.0
      %586 = vmatprep.subr.mxu0 0.0
      %587 = vmatpush1.msra.mxu0 0.0
      %588 = vmatprep.subr.mxu0 0.0
      %589 = vmatpush1.msra.mxu0 0.0
      %590 = vmatprep.subr.mxu0 0.0
      %591 = vmatpush1.msra.mxu0 0.0
      %592 = vmatprep.subr.mxu0 0.0
      %593 = vmatpush1.msra.mxu0 0.0
      %594 = vmatprep.subr.mxu0 0.0
      %595 = vmatpush1.msra.mxu0 0.0
      %596 = vmatprep.subr.mxu0 0.0
      %597 = vmatpush1.msra.mxu0 0.0
      %598 = vmatprep.subr.mxu0 0.0
      %599 = vmatpush1.msra.mxu0 0.0
      %600 = vmatprep.subr.mxu0 0.0
      %601 = vmatpush1.msra.mxu0 0.0
      %602 = vmatprep.subr.mxu0 0.0
      %603 = vmatpush1.msra.mxu0 0.0
      %604 = vmatprep.mubr.f32.mxu0 0.0
      %605 = vmatmul.mubr.f32.gmra.mrb[0].mxu0 %v332
      %v606 = vpop.f32.mrb[0].mxu0
      %v607 = vadd.f32 0.0, %v606
      %v608 = vpop.f32.mrb[0].mxu0
      %v609 = vadd.f32 0.0, %v608
      %610 = vmatprep.mubr.f32.mxu0 0.0
      %611 = vmatmul.mubr.f32.gmra.mrb[0].mxu0 %v335
      %v612 = vpop.f32.mrb[0].mxu0
      %v613 = vadd.f32 0.0, %v612
      %v614 = vpop.f32.mrb[0].mxu0
      %v615 = vadd.f32 0.0, %v614
      %616 = vmatprep.mubr.f32.mxu0 0.0
      %617 = vmatmul.mubr.f32.gmra.mrb[0].mxu0 %v338
      %v618 = vpop.f32.mrb[0].mxu0
      %v619 = vadd.f32 0.0, %v618
      %v620 = vpop.f32.mrb[0].mxu0
      %v621 = vadd.f32 0.0, %v620
      %622 = vmatprep.mubr.f32.mxu0 0.0
      %623 = vmatmul.mubr.f32.gmra.mrb[0].mxu0 %v341
      %v624 = vpop.f32.mrb[0].mxu0
      %v625 = vadd.f32 0.0, %v624
      %v626 = vpop.f32.mrb[0].mxu0
      %v627 = vadd.f32 0.0, %v626
      %628 = vmatprep.mubr.f32.mxu0 0.0
      %629 = vmatmul.mubr.f32.gmra.mrb[0].mxu0 %v344
      %v630 = vpop.f32.mrb[0].mxu0
      %v631 = vadd.f32 0.0, %v630
      %v632 = vpop.f32.mrb[0].mxu0
      %v633 = vadd.f32 0.0, %v632
      %634 = vmatprep.mubr.f32.mxu0 0.0
      %635 = vmatmul.mubr.f32.gmra.mrb[0].mxu0 %v347
      %v636 = vpop.f32.mrb[0].mxu0
      %v637 = vadd.f32 0.0, %v636
      %v638 = vpop.f32.mrb[0].mxu0
      %v639 = vadd.f32 0.0, %v638
      %640 = vmatprep.mubr.f32.mxu0 0.0
      %641 = vmatmul.mubr.f32.gmra.mrb[0].mxu0 %v350
      %v642 = vpop.f32.mrb[0].mxu0
      %v643 = vadd.f32 0.0, %v642
      %v644 = vpop.f32.mrb[0].mxu0
      %v645 = vadd.f32 0.0, %v644
      %646 = vmatprep.mubr.f32.mxu0 0.0
      %647 = vmatmul.mubr.f32.gmra.mrb[0].mxu0 %v353
      %v648 = vpop.f32.mrb[0].mxu0
      %v649 = vadd.f32 0.0, %v648
      %v650 = vpop.f32.mrb[0].mxu0
      %v651 = vadd.f32 0.0, %v650
      %652 = vmatprep.mubr.f32.mxu0 0.0
      %653 = vmatmul.mubr.f32.gmra.mrb[0].mxu0 %v356
      %v654 = vpop.f32.mrb[0].mxu0
      %v655 = vadd.f32 0.0, %v654
      %v656 = vpop.f32.mrb[0].mxu0
      %v657 = vadd.f32 0.0, %v656
      %658 = vmatprep.mubr.f32.mxu0 0.0
      %659 = vmatmul.mubr.f32.gmra.mrb[0].mxu0 %v359
      %v660 = vpop.f32.mrb[0].mxu0
      %v661 = vadd.f32 0.0, %v660
      %v662 = vpop.f32.mrb[0].mxu0
      %v663 = vadd.f32 0.0, %v662
      %664 = vmatprep.mubr.f32.mxu0 0.0
      %665 = vmatmul.mubr.f32.gmra.mrb[0].mxu0 %v362
      %v666 = vpop.f32.mrb[0].mxu0
      %v667 = vadd.f32 0.0, %v666
      %v668 = vpop.f32.mrb[0].mxu0
      %v669 = vadd.f32 0.0, %v668
      %670 = vmatprep.mubr.f32.mxu0 0.0
      %671 = vmatmul.mubr.f32.gmra.mrb[0].mxu0 %v365
      %v672 = vpop.f32.mrb[0].mxu0
      %v673 = vadd.f32 0.0, %v672
      %v674 = vpop.f32.mrb[0].mxu0
      %v675 = vadd.f32 0.0, %v674
      %676 = vmatprep.mubr.f32.mxu0 0.0
      %677 = vmatmul.mubr.f32.gmra.mrb[0].mxu0 %v368
      %v678 = vpop.f32.mrb[0].mxu0
      %v679 = vadd.f32 0.0, %v678
      %v680 = vpop.f32.mrb[0].mxu0
      %v681 = vadd.f32 0.0, %v680
      %682 = vmatprep.mubr.f32.mxu0 0.0
      %683 = vmatmul.mubr.f32.gmra.mrb[0].mxu0 %v371
      %v684 = vpop.f32.mrb[0].mxu0
      %v685 = vadd.f32 0.0, %v684
      %v686 = vpop.f32.mrb[0].mxu0
      %v687 = vadd.f32 0.0, %v686
      %688 = vmatprep.mubr.f32.mxu0 0.0
      %689 = vmatmul.mubr.f32.gmra.mrb[0].mxu0 %v374
      %v690 = vpop.f32.mrb[0].mxu0
      %v691 = vadd.f32 0.0, %v690
      %v692 = vpop.f32.mrb[0].mxu0
      %v693 = vadd.f32 0.0, %v692
      %694 = vmatprep.mubr.f32.mxu0 0.0
      %695 = vmatmul.mubr.f32.gmra.mrb[0].mxu0 %v377
      %v696 = vpop.f32.mrb[0].mxu0
      %v697 = vadd.f32 0.0, %v696
      %v698 = vpop.f32.mrb[0].mxu0
      %v699 = vadd.f32 0.0, %v698
      %700 = vdwg.mxu0
      %v701 = vmax.f32 %v446, 0.0
      %v702 = vmax.f32 %v448, 0.0
      %v703 = vmax.f32 %v607, 0.0
      %v704 = vmax.f32 %v609, 0.0
      %v705 = vmax.f32 %v452, 0.0
      %v706 = vmax.f32 %v454, 0.0
      %v707 = vmax.f32 %v613, 0.0
      %v708 = vmax.f32 %v615, 0.0
      %v709 = vmax.f32 %v458, 0.0
      %v710 = vmax.f32 %v460, 0.0
      %v711 = vmax.f32 %v619, 0.0
      %v712 = vmax.f32 %v621, 0.0
      %v713 = vmax.f32 %v464, 0.0
      %v714 = vmax.f32 %v466, 0.0
      %v715 = vmax.f32 %v625, 0.0
      %v716 = vmax.f32 %v627, 0.0
      %v717 = vmax.f32 %v470, 0.0
      %v718 = vmax.f32 %v472, 0.0
      %v719 = vmax.f32 %v631, 0.0
      %v720 = vmax.f32 %v633, 0.0
      %v721 = vmax.f32 %v476, 0.0
      %v722 = vmax.f32 %v478, 0.0
      %v723 = vmax.f32 %v637, 0.0
      %v724 = vmax.f32 %v639, 0.0
      %v725 = vmax.f32 %v482, 0.0
      %v726 = vmax.f32 %v484, 0.0
      %v727 = vmax.f32 %v643, 0.0
      %v728 = vmax.f32 %v645, 0.0
      %v729 = vmax.f32 %v488, 0.0
      %v730 = vmax.f32 %v490, 0.0
      %v731 = vmax.f32 %v649, 0.0
      %v732 = vmax.f32 %v651, 0.0
      %v733 = vmax.f32 %v494, 0.0
      %v734 = vmax.f32 %v496, 0.0
      %v735 = vmax.f32 %v655, 0.0
      %v736 = vmax.f32 %v657, 0.0
      %v737 = vmax.f32 %v500, 0.0
      %v738 = vmax.f32 %v502, 0.0
      %v739 = vmax.f32 %v661, 0.0
      %v740 = vmax.f32 %v663, 0.0
      %v741 = vmax.f32 %v506, 0.0
      %v742 = vmax.f32 %v508, 0.0
      %v743 = vmax.f32 %v667, 0.0
      %v744 = vmax.f32 %v669, 0.0
      %v745 = vmax.f32 %v512, 0.0
      %v746 = vmax.f32 %v514, 0.0
      %v747 = vmax.f32 %v673, 0.0
      %v748 = vmax.f32 %v675, 0.0
      %v749 = vmax.f32 %v518, 0.0
      %v750 = vmax.f32 %v520, 0.0
      %v751 = vmax.f32 %v679, 0.0
      %v752 = vmax.f32 %v681, 0.0
      %v753 = vmax.f32 %v524, 0.0
      %v754 = vmax.f32 %v526, 0.0
      %v755 = vmax.f32 %v685, 0.0
      %v756 = vmax.f32 %v687, 0.0
      %v757 = vmax.f32 %v530, 0.0
      %v758 = vmax.f32 %v532, 0.0
      %v759 = vmax.f32 %v691, 0.0
      %v760 = vmax.f32 %v693, 0.0
      %v761 = vmax.f32 %v536, 0.0
      %v762 = vmax.f32 %v538, 0.0
      %v763 = vmax.f32 %v697, 0.0
      %v764 = vmax.f32 %v699, 0.0
      %v765 = vpack.c.bf16 %v705, %v701
      %v766 = vpack.c.bf16 %v706, %v702
      %v767 = vpack.c.bf16 %v707, %v703
      %v768 = vpack.c.bf16 %v708, %v704
      %v769 = vpack.c.bf16 %v713, %v709
      %v770 = vpack.c.bf16 %v714, %v710
      %v771 = vpack.c.bf16 %v715, %v711
      %v772 = vpack.c.bf16 %v716, %v712
      %v773 = vpack.c.bf16 %v721, %v717
      %v774 = vpack.c.bf16 %v722, %v718
      %v775 = vpack.c.bf16 %v723, %v719
      %v776 = vpack.c.bf16 %v724, %v720
      %v777 = vpack.c.bf16 %v729, %v725
      %v778 = vpack.c.bf16 %v730, %v726
      %v779 = vpack.c.bf16 %v731, %v727
      %v780 = vpack.c.bf16 %v732, %v728
      %v781 = vpack.c.bf16 %v737, %v733
      %v782 = vpack.c.bf16 %v738, %v734
      %v783 = vpack.c.bf16 %v739, %v735
      %v784 = vpack.c.bf16 %v740, %v736
      %v785 = vpack.c.bf16 %v745, %v741
      %v786 = vpack.c.bf16 %v746, %v742
      %v787 = vpack.c.bf16 %v747, %v743
      %v788 = vpack.c.bf16 %v748, %v744
      %v789 = vpack.c.bf16 %v753, %v749
      %v790 = vpack.c.bf16 %v754, %v750
      %v791 = vpack.c.bf16 %v755, %v751
      %v792 = vpack.c.bf16 %v756, %v752
      %v793 = vpack.c.bf16 %v761, %v757
      %v794 = vpack.c.bf16 %v762, %v758
      %v795 = vpack.c.bf16 %v763, %v759
      %v796 = vpack.c.bf16 %v764, %v760
      %v797 = vld [vmem:[%s2] sm:$0xf]
      %v798 = vld [vmem:[%s2 + $0x4] sm:$0xf]
      %v799 = vld [vmem:[%s2 + $0x8] sm:$0xf]
      %v800 = vld [vmem:[%s2 + $0xc] sm:$0xf]
      %v801 = vld [vmem:[%s2 + $0x10] sm:$0xf]
      %v802 = vld [vmem:[%s2 + $0x14] sm:$0xf]
      %v803 = vld [vmem:[%s2 + $0x18] sm:$0xf]
      %v804 = vld [vmem:[%s2 + $0x1c] sm:$0xf]
      %v805 = vld [vmem:[%s2 + $0x20] sm:$0xf]
      %v806 = vld [vmem:[%s2 + $0x24] sm:$0xf]
      %v807 = vld [vmem:[%s2 + $0x28] sm:$0xf]
      %v808 = vld [vmem:[%s2 + $0x2c] sm:$0xf]
      %v809 = vld [vmem:[%s2 + $0x30] sm:$0xf]
      %v810 = vld [vmem:[%s2 + $0x34] sm:$0xf]
      %v811 = vld [vmem:[%s2 + $0x38] sm:$0xf]
      %v812 = vld [vmem:[%s2 + $0x3c] sm:$0xf]
      %v813 = vld [vmem:[%s3] sm:$0xff]
      %v814 = vld [vmem:[%s3 + $0x8] sm:$0xff]
      %v815 = vld [vmem:[%s3 + $0x10] sm:$0xff]
      %v816 = vld [vmem:[%s3 + $0x18] sm:$0xff]
      %v817 = vld [vmem:[%s3 + $0x20] sm:$0xff]
      %v818 = vld [vmem:[%s3 + $0x28] sm:$0xff]
      %v819 = vld [vmem:[%s3 + $0x30] sm:$0xff]
      %v820 = vld [vmem:[%s3 + $0x38] sm:$0xff]
      %v821 = vld [vmem:[%s3 + $0x40] sm:$0xff]
      %v822 = vld [vmem:[%s3 + $0x48] sm:$0xff]
      %v823 = vld [vmem:[%s3 + $0x50] sm:$0xff]
      %v824 = vld [vmem:[%s3 + $0x58] sm:$0xff]
      %v825 = vld [vmem:[%s3 + $0x60] sm:$0xff]
      %v826 = vld [vmem:[%s3 + $0x68] sm:$0xff]
      %v827 = vld [vmem:[%s3 + $0x70] sm:$0xff]
      %v828 = vld [vmem:[%s3 + $0x78] sm:$0xff]
      %830 = vset.pattern.permute.xlu0 0
      %831 = vperm.xlu0 %830, %v813
      %v832 = vpop.permute.xlu0 %831
      %835 = vset.pattern.permute.xlu0 0
      %836 = vperm.xlu0 %835, %v814
      %v837 = vpop.permute.xlu0 %836
      %840 = vset.pattern.permute.xlu0 0
      %841 = vperm.xlu0 %840, %v815
      %v842 = vpop.permute.xlu0 %841
      %845 = vset.pattern.permute.xlu0 0
      %846 = vperm.xlu0 %845, %v816
      %v847 = vpop.permute.xlu0 %846
      %850 = vset.pattern.permute.xlu0 0
      %851 = vperm.xlu0 %850, %v817
      %v852 = vpop.permute.xlu0 %851
      %855 = vset.pattern.permute.xlu0 0
      %856 = vperm.xlu0 %855, %v818
      %v857 = vpop.permute.xlu0 %856
      %860 = vset.pattern.permute.xlu0 0
      %861 = vperm.xlu0 %860, %v819
      %v862 = vpop.permute.xlu0 %861
      %865 = vset.pattern.permute.xlu0 0
      %866 = vperm.xlu0 %865, %v820
      %v867 = vpop.permute.xlu0 %866
      %870 = vset.pattern.permute.xlu0 0
      %871 = vperm.xlu0 %870, %v821
      %v872 = vpop.permute.xlu0 %871
      %875 = vset.pattern.permute.xlu0 0
      %876 = vperm.xlu0 %875, %v822
      %v877 = vpop.permute.xlu0 %876
      %880 = vset.pattern.permute.xlu0 0
      %881 = vperm.xlu0 %880, %v823
      %v882 = vpop.permute.xlu0 %881
      %885 = vset.pattern.permute.xlu0 0
      %886 = vperm.xlu0 %885, %v824
      %v887 = vpop.permute.xlu0 %886
      %890 = vset.pattern.permute.xlu0 0
      %891 = vperm.xlu0 %890, %v825
      %v892 = vpop.permute.xlu0 %891
      %895 = vset.pattern.permute.xlu0 0
      %896 = vperm.xlu0 %895, %v826
      %v897 = vpop.permute.xlu0 %896
      %900 = vset.pattern.permute.xlu0 0
      %901 = vperm.xlu0 %900, %v827
      %v902 = vpop.permute.xlu0 %901
      %905 = vset.pattern.permute.xlu0 0
      %906 = vperm.xlu0 %905, %v828
      %v907 = vpop.permute.xlu0 %906
      %v925 = vunpack.c.l.b16 %v797
      %v926 = vunpack.c.l.b16 %v798
      %v927 = vunpack.c.l.b16 %v799
      %v928 = vunpack.c.l.b16 %v800
      %v929 = vunpack.c.l.b16 %v801
      %v930 = vunpack.c.l.b16 %v802
      %v931 = vunpack.c.l.b16 %v803
      %v932 = vunpack.c.l.b16 %v804
      %v933 = vunpack.c.l.b16 %v805
      %v934 = vunpack.c.l.b16 %v806
      %v935 = vunpack.c.l.b16 %v807
      %v936 = vunpack.c.l.b16 %v808
      %v937 = vunpack.c.l.b16 %v809
      %v938 = vunpack.c.l.b16 %v810
      %v939 = vunpack.c.l.b16 %v811
      %v940 = vunpack.c.l.b16 %v812
      %v941 = vpack.c.b16 %v926, %v925
      %v942 = vpack.c.b16 %v928, %v927
      %v943 = vpack.c.b16 %v930, %v929
      %v944 = vpack.c.b16 %v932, %v931
      %v945 = vpack.c.b16 %v934, %v933
      %v946 = vpack.c.b16 %v936, %v935
      %v947 = vpack.c.b16 %v938, %v937
      %v948 = vpack.c.b16 %v940, %v939
      %957 = vmatprep.subr.bf16.mxu0 %v766
      %958 = vmatpush1.bf16.msra.mxu0 %v765
      %959 = vmatprep.subr.bf16.mxu0 %v770
      %960 = vmatpush1.bf16.msra.mxu0 %v769
      %961 = vmatprep.subr.bf16.mxu0 %v774
      %962 = vmatpush1.bf16.msra.mxu0 %v773
      %963 = vmatprep.subr.bf16.mxu0 %v778
      %964 = vmatpush1.bf16.msra.mxu0 %v777
      %965 = vmatprep.subr.bf16.mxu0 %v782
      %966 = vmatpush1.bf16.msra.mxu0 %v781
      %967 = vmatprep.subr.bf16.mxu0 %v786
      %968 = vmatpush1.bf16.msra.mxu0 %v785
      %969 = vmatprep.subr.bf16.mxu0 %v790
      %970 = vmatpush1.bf16.msra.mxu0 %v789
      %971 = vmatprep.subr.bf16.mxu0 %v794
      %972 = vmatpush1.bf16.msra.mxu0 %v793
      %973 = vmatprep.subr.bf16.mxu0 0
      %974 = vmatpush1.bf16.msra.mxu0 0
      %975 = vmatprep.subr.bf16.mxu0 0
      %976 = vmatpush1.bf16.msra.mxu0 0
      %977 = vmatprep.subr.bf16.mxu0 0
      %978 = vmatpush1.bf16.msra.mxu0 0
      %979 = vmatprep.subr.bf16.mxu0 0
      %980 = vmatpush1.bf16.msra.mxu0 0
      %981 = vmatprep.subr.bf16.mxu0 0
      %982 = vmatpush1.bf16.msra.mxu0 0
      %983 = vmatprep.subr.bf16.mxu0 0
      %984 = vmatpush1.bf16.msra.mxu0 0
      %985 = vmatprep.subr.bf16.mxu0 0
      %986 = vmatpush1.bf16.msra.mxu0 0
      %987 = vmatprep.subr.bf16.mxu0 0
      %988 = vmatpush1.bf16.msra.mxu0 0
      %989 = vmatprep.mubr.bf16.mxu0 0
      %990 = vmatmul.mubr.bf16.gmra.mrb[0].mxu0 %v941
      %v991 = vpop.f32.mrb[0].mxu0
      %v992 = vadd.f32 %v832, %v991
      %v993 = vpop.f32.mrb[0].mxu0
      %v994 = vadd.f32 %v832, %v993
      %v995 = vpop.f32.mrb[0].mxu0
      %v996 = vadd.f32 %v837, %v995
      %v997 = vpop.f32.mrb[0].mxu0
      %v998 = vadd.f32 %v837, %v997
      %999 = vmatprep.mubr.bf16.mxu0 0
      %1000 = vmatmul.mubr.bf16.gmra.mrb[0].mxu0 %v942
      %v1001 = vpop.f32.mrb[0].mxu0
      %v1002 = vadd.f32 %v842, %v1001
      %v1003 = vpop.f32.mrb[0].mxu0
      %v1004 = vadd.f32 %v842, %v1003
      %v1005 = vpop.f32.mrb[0].mxu0
      %v1006 = vadd.f32 %v847, %v1005
      %v1007 = vpop.f32.mrb[0].mxu0
      %v1008 = vadd.f32 %v847, %v1007
      %1009 = vmatprep.mubr.bf16.mxu0 0
      %1010 = vmatmul.mubr.bf16.gmra.mrb[0].mxu0 %v943
      %v1011 = vpop.f32.mrb[0].mxu0
      %v1012 = vadd.f32 %v852, %v1011
      %v1013 = vpop.f32.mrb[0].mxu0
      %v1014 = vadd.f32 %v852, %v1013
      %v1015 = vpop.f32.mrb[0].mxu0
      %v1016 = vadd.f32 %v857, %v1015
      %v1017 = vpop.f32.mrb[0].mxu0
      %v1018 = vadd.f32 %v857, %v1017
      %1019 = vmatprep.mubr.bf16.mxu0 0
      %1020 = vmatmul.mubr.bf16.gmra.mrb[0].mxu0 %v944
      %v1021 = vpop.f32.mrb[0].mxu0
      %v1022 = vadd.f32 %v862, %v1021
      %v1023 = vpop.f32.mrb[0].mxu0
      %v1024 = vadd.f32 %v862, %v1023
      %v1025 = vpop.f32.mrb[0].mxu0
      %v1026 = vadd.f32 %v867, %v1025
      %v1027 = vpop.f32.mrb[0].mxu0
      %v1028 = vadd.f32 %v867, %v1027
      %1029 = vmatprep.mubr.bf16.mxu0 0
      %1030 = vmatmul.mubr.bf16.gmra.mrb[0].mxu0 %v945
      %v1031 = vpop.f32.mrb[0].mxu0
      %v1032 = vadd.f32 %v872, %v1031
      %v1033 = vpop.f32.mrb[0].mxu0
      %v1034 = vadd.f32 %v872, %v1033
      %v1035 = vpop.f32.mrb[0].mxu0
      %v1036 = vadd.f32 %v877, %v1035
      %v1037 = vpop.f32.mrb[0].mxu0
      %v1038 = vadd.f32 %v877, %v1037
      %1039 = vmatprep.mubr.bf16.mxu0 0
      %1040 = vmatmul.mubr.bf16.gmra.mrb[0].mxu0 %v946
      %v1041 = vpop.f32.mrb[0].mxu0
      %v1042 = vadd.f32 %v882, %v1041
      %v1043 = vpop.f32.mrb[0].mxu0
      %v1044 = vadd.f32 %v882, %v1043
      %v1045 = vpop.f32.mrb[0].mxu0
      %v1046 = vadd.f32 %v887, %v1045
      %v1047 = vpop.f32.mrb[0].mxu0
      %v1048 = vadd.f32 %v887, %v1047
      %1049 = vmatprep.mubr.bf16.mxu0 0
      %1050 = vmatmul.mubr.bf16.gmra.mrb[0].mxu0 %v947
      %v1051 = vpop.f32.mrb[0].mxu0
      %v1052 = vadd.f32 %v892, %v1051
      %v1053 = vpop.f32.mrb[0].mxu0
      %v1054 = vadd.f32 %v892, %v1053
      %v1055 = vpop.f32.mrb[0].mxu0
      %v1056 = vadd.f32 %v897, %v1055
      %v1057 = vpop.f32.mrb[0].mxu0
      %v1058 = vadd.f32 %v897, %v1057
      %1059 = vmatprep.mubr.bf16.mxu0 0
      %1060 = vmatmul.mubr.bf16.gmra.mrb[0].mxu0 %v948
      %v1061 = vpop.f32.mrb[0].mxu0
      %v1062 = vadd.f32 %v902, %v1061
      %v1063 = vpop.f32.mrb[0].mxu0
      %v1064 = vadd.f32 %v902, %v1063
      %v1065 = vpop.f32.mrb[0].mxu0
      %v1066 = vadd.f32 %v907, %v1065
      %v1067 = vpop.f32.mrb[0].mxu0
      %v1068 = vadd.f32 %v907, %v1067
      %1069 = vdwg.mxu0
      %1070 = vmatprep.subr.bf16.mxu0 %v768
      %1071 = vmatpush1.bf16.msra.mxu0 %v767
      %1072 = vmatprep.subr.bf16.mxu0 %v772
      %1073 = vmatpush1.bf16.msra.mxu0 %v771
      %1074 = vmatprep.subr.bf16.mxu0 %v776
      %1075 = vmatpush1.bf16.msra.mxu0 %v775
      %1076 = vmatprep.subr.bf16.mxu0 %v780
      %1077 = vmatpush1.bf16.msra.mxu0 %v779
      %1078 = vmatprep.subr.bf16.mxu0 %v784
      %1079 = vmatpush1.bf16.msra.mxu0 %v783
      %1080 = vmatprep.subr.bf16.mxu0 %v788
      %1081 = vmatpush1.bf16.msra.mxu0 %v787
      %1082 = vmatprep.subr.bf16.mxu0 %v792
      %1083 = vmatpush1.bf16.msra.mxu0 %v791
      %1084 = vmatprep.subr.bf16.mxu0 %v796
      %1085 = vmatpush1.bf16.msra.mxu0 %v795
      %1086 = vmatprep.subr.bf16.mxu0 0
      %1087 = vmatpush1.bf16.msra.mxu0 0
      %1088 = vmatprep.subr.bf16.mxu0 0
      %1089 = vmatpush1.bf16.msra.mxu0 0
      %1090 = vmatprep.subr.bf16.mxu0 0
      %1091 = vmatpush1.bf16.msra.mxu0 0
      %1092 = vmatprep.subr.bf16.mxu0 0
      %1093 = vmatpush1.bf16.msra.mxu0 0
      %1094 = vmatprep.subr.bf16.mxu0 0
      %1095 = vmatpush1.bf16.msra.mxu0 0
      %1096 = vmatprep.subr.bf16.mxu0 0
      %1097 = vmatpush1.bf16.msra.mxu0 0
      %1098 = vmatprep.subr.bf16.mxu0 0
      %1099 = vmatpush1.bf16.msra.mxu0 0
      %1100 = vmatprep.subr.bf16.mxu0 0
      %1101 = vmatpush1.bf16.msra.mxu0 0
      %1102 = vmatprep.mubr.bf16.mxu0 0
      %1103 = vmatmul.mubr.bf16.gmra.mrb[0].mxu0 %v941
      %v1104 = vpop.f32.mrb[0].mxu0
      %v1105 = vadd.f32 %v832, %v1104
      %v1106 = vpop.f32.mrb[0].mxu0
      %v1107 = vadd.f32 %v832, %v1106
      %v1108 = vpop.f32.mrb[0].mxu0
      %v1109 = vadd.f32 %v837, %v1108
      %v1110 = vpop.f32.mrb[0].mxu0
      %v1111 = vadd.f32 %v837, %v1110
      %1112 = vmatprep.mubr.bf16.mxu0 0
      %1113 = vmatmul.mubr.bf16.gmra.mrb[0].mxu0 %v942
      %v1114 = vpop.f32.mrb[0].mxu0
      %v1115 = vadd.f32 %v842, %v1114
      %v1116 = vpop.f32.mrb[0].mxu0
      %v1117 = vadd.f32 %v842, %v1116
      %v1118 = vpop.f32.mrb[0].mxu0
      %v1119 = vadd.f32 %v847, %v1118
      %v1120 = vpop.f32.mrb[0].mxu0
      %v1121 = vadd.f32 %v847, %v1120
      %1122 = vmatprep.mubr.bf16.mxu0 0
      %1123 = vmatmul.mubr.bf16.gmra.mrb[0].mxu0 %v943
      %v1124 = vpop.f32.mrb[0].mxu0
      %v1125 = vadd.f32 %v852, %v1124
      %v1126 = vpop.f32.mrb[0].mxu0
      %v1127 = vadd.f32 %v852, %v1126
      %v1128 = vpop.f32.mrb[0].mxu0
      %v1129 = vadd.f32 %v857, %v1128
      %v1130 = vpop.f32.mrb[0].mxu0
      %v1131 = vadd.f32 %v857, %v1130
      %1132 = vmatprep.mubr.bf16.mxu0 0
      %1133 = vmatmul.mubr.bf16.gmra.mrb[0].mxu0 %v944
      %v1134 = vpop.f32.mrb[0].mxu0
      %v1135 = vadd.f32 %v862, %v1134
      %v1136 = vpop.f32.mrb[0].mxu0
      %v1137 = vadd.f32 %v862, %v1136
      %v1138 = vpop.f32.mrb[0].mxu0
      %v1139 = vadd.f32 %v867, %v1138
      %v1140 = vpop.f32.mrb[0].mxu0
      %v1141 = vadd.f32 %v867, %v1140
      %1142 = vmatprep.mubr.bf16.mxu0 0
      %1143 = vmatmul.mubr.bf16.gmra.mrb[0].mxu0 %v945
      %v1144 = vpop.f32.mrb[0].mxu0
      %v1145 = vadd.f32 %v872, %v1144
      %v1146 = vpop.f32.mrb[0].mxu0
      %v1147 = vadd.f32 %v872, %v1146
      %v1148 = vpop.f32.mrb[0].mxu0
      %v1149 = vadd.f32 %v877, %v1148
      %v1150 = vpop.f32.mrb[0].mxu0
      %v1151 = vadd.f32 %v877, %v1150
      %1152 = vmatprep.mubr.bf16.mxu0 0
      %1153 = vmatmul.mubr.bf16.gmra.mrb[0].mxu0 %v946
      %v1154 = vpop.f32.mrb[0].mxu0
      %v1155 = vadd.f32 %v882, %v1154
      %v1156 = vpop.f32.mrb[0].mxu0
      %v1157 = vadd.f32 %v882, %v1156
      %v1158 = vpop.f32.mrb[0].mxu0
      %v1159 = vadd.f32 %v887, %v1158
      %v1160 = vpop.f32.mrb[0].mxu0
      %v1161 = vadd.f32 %v887, %v1160
      %1162 = vmatprep.mubr.bf16.mxu0 0
      %1163 = vmatmul.mubr.bf16.gmra.mrb[0].mxu0 %v947
      %v1164 = vpop.f32.mrb[0].mxu0
      %v1165 = vadd.f32 %v892, %v1164
      %v1166 = vpop.f32.mrb[0].mxu0
      %v1167 = vadd.f32 %v892, %v1166
      %v1168 = vpop.f32.mrb[0].mxu0
      %v1169 = vadd.f32 %v897, %v1168
      %v1170 = vpop.f32.mrb[0].mxu0
      %v1171 = vadd.f32 %v897, %v1170
      %1172 = vmatprep.mubr.bf16.mxu0 0
      %1173 = vmatmul.mubr.bf16.gmra.mrb[0].mxu0 %v948
      %v1174 = vpop.f32.mrb[0].mxu0
      %v1175 = vadd.f32 %v902, %v1174
      %v1176 = vpop.f32.mrb[0].mxu0
      %v1177 = vadd.f32 %v902, %v1176
      %v1178 = vpop.f32.mrb[0].mxu0
      %v1179 = vadd.f32 %v907, %v1178
      %v1180 = vpop.f32.mrb[0].mxu0
      %v1181 = vadd.f32 %v907, %v1180
      %1182 = vdwg.mxu0
      %v1183 = vmax.f32 %v992, 0.0
      %v1184 = vmax.f32 %v994, 0.0
      %v1185 = vmax.f32 %v1105, 0.0
      %v1186 = vmax.f32 %v1107, 0.0
      %v1187 = vmax.f32 %v996, 0.0
      %v1188 = vmax.f32 %v998, 0.0
      %v1189 = vmax.f32 %v1109, 0.0
      %v1190 = vmax.f32 %v1111, 0.0
      %v1191 = vmax.f32 %v1002, 0.0
      %v1192 = vmax.f32 %v1004, 0.0
      %v1193 = vmax.f32 %v1115, 0.0
      %v1194 = vmax.f32 %v1117, 0.0
      %v1195 = vmax.f32 %v1006, 0.0
      %v1196 = vmax.f32 %v1008, 0.0
      %v1197 = vmax.f32 %v1119, 0.0
      %v1198 = vmax.f32 %v1121, 0.0
      %v1199 = vmax.f32 %v1012, 0.0
      %v1200 = vmax.f32 %v1014, 0.0
      %v1201 = vmax.f32 %v1125, 0.0
      %v1202 = vmax.f32 %v1127, 0.0
      %v1203 = vmax.f32 %v1016, 0.0
      %v1204 = vmax.f32 %v1018, 0.0
      %v1205 = vmax.f32 %v1129, 0.0
      %v1206 = vmax.f32 %v1131, 0.0
      %v1207 = vmax.f32 %v1022, 0.0
      %v1208 = vmax.f32 %v1024, 0.0
      %v1209 = vmax.f32 %v1135, 0.0
      %v1210 = vmax.f32 %v1137, 0.0
      %v1211 = vmax.f32 %v1026, 0.0
      %v1212 = vmax.f32 %v1028, 0.0
      %v1213 = vmax.f32 %v1139, 0.0
      %v1214 = vmax.f32 %v1141, 0.0
      %v1215 = vmax.f32 %v1032, 0.0
      %v1216 = vmax.f32 %v1034, 0.0
      %v1217 = vmax.f32 %v1145, 0.0
      %v1218 = vmax.f32 %v1147, 0.0
      %v1219 = vmax.f32 %v1036, 0.0
      %v1220 = vmax.f32 %v1038, 0.0
      %v1221 = vmax.f32 %v1149, 0.0
      %v1222 = vmax.f32 %v1151, 0.0
      %v1223 = vmax.f32 %v1042, 0.0
      %v1224 = vmax.f32 %v1044, 0.0
      %v1225 = vmax.f32 %v1155, 0.0
      %v1226 = vmax.f32 %v1157, 0.0
      %v1227 = vmax.f32 %v1046, 0.0
      %v1228 = vmax.f32 %v1048, 0.0
      %v1229 = vmax.f32 %v1159, 0.0
      %v1230 = vmax.f32 %v1161, 0.0
      %v1231 = vmax.f32 %v1052, 0.0
      %v1232 = vmax.f32 %v1054, 0.0
      %v1233 = vmax.f32 %v1165, 0.0
      %v1234 = vmax.f32 %v1167, 0.0
      %v1235 = vmax.f32 %v1056, 0.0
      %v1236 = vmax.f32 %v1058, 0.0
      %v1237 = vmax.f32 %v1169, 0.0
      %v1238 = vmax.f32 %v1171, 0.0
      %v1239 = vmax.f32 %v1062, 0.0
      %v1240 = vmax.f32 %v1064, 0.0
      %v1241 = vmax.f32 %v1175, 0.0
      %v1242 = vmax.f32 %v1177, 0.0
      %v1243 = vmax.f32 %v1066, 0.0
      %v1244 = vmax.f32 %v1068, 0.0
      %v1245 = vmax.f32 %v1179, 0.0
      %v1246 = vmax.f32 %v1181, 0.0
      %v1247 = vpack.c.bf16 %v1187, %v1183
      %v1248 = vpack.c.bf16 %v1188, %v1184
      %v1249 = vpack.c.bf16 %v1189, %v1185
      %v1250 = vpack.c.bf16 %v1190, %v1186
      %v1251 = vpack.c.bf16 %v1195, %v1191
      %v1252 = vpack.c.bf16 %v1196, %v1192
      %v1253 = vpack.c.bf16 %v1197, %v1193
      %v1254 = vpack.c.bf16 %v1198, %v1194
      %v1255 = vpack.c.bf16 %v1203, %v1199
      %v1256 = vpack.c.bf16 %v1204, %v1200
      %v1257 = vpack.c.bf16 %v1205, %v1201
      %v1258 = vpack.c.bf16 %v1206, %v1202
      %v1259 = vpack.c.bf16 %v1211, %v1207
      %v1260 = vpack.c.bf16 %v1212, %v1208
      %v1261 = vpack.c.bf16 %v1213, %v1209
      %v1262 = vpack.c.bf16 %v1214, %v1210
      %v1263 = vpack.c.bf16 %v1219, %v1215
      %v1264 = vpack.c.bf16 %v1220, %v1216
      %v1265 = vpack.c.bf16 %v1221, %v1217
      %v1266 = vpack.c.bf16 %v1222, %v1218
      %v1267 = vpack.c.bf16 %v1227, %v1223
      %v1268 = vpack.c.bf16 %v1228, %v1224
      %v1269 = vpack.c.bf16 %v1229, %v1225
      %v1270 = vpack.c.bf16 %v1230, %v1226
      %v1271 = vpack.c.bf16 %v1235, %v1231
      %v1272 = vpack.c.bf16 %v1236, %v1232
      %v1273 = vpack.c.bf16 %v1237, %v1233
      %v1274 = vpack.c.bf16 %v1238, %v1234
      %v1275 = vpack.c.bf16 %v1243, %v1239
      %v1276 = vpack.c.bf16 %v1244, %v1240
      %v1277 = vpack.c.bf16 %v1245, %v1241
      %v1278 = vpack.c.bf16 %v1246, %v1242
      %v1279 = vld [vmem:[%s4] sm:$0xf]
      %v1280 = vld [vmem:[%s4 + $0x4] sm:$0xf]
      %v1281 = vld [vmem:[%s4 + $0x8] sm:$0xf]
      %v1282 = vld [vmem:[%s4 + $0xc] sm:$0xf]
      %v1283 = vld [vmem:[%s4 + $0x10] sm:$0xf]
      %v1284 = vld [vmem:[%s4 + $0x14] sm:$0xf]
      %v1285 = vld [vmem:[%s4 + $0x18] sm:$0xf]
      %v1286 = vld [vmem:[%s4 + $0x1c] sm:$0xf]
      %v1287 = vld [vmem:[%s4 + $0x20] sm:$0xf]
      %v1288 = vld [vmem:[%s4 + $0x24] sm:$0xf]
      %v1289 = vld [vmem:[%s4 + $0x28] sm:$0xf]
      %v1290 = vld [vmem:[%s4 + $0x2c] sm:$0xf]
      %v1291 = vld [vmem:[%s4 + $0x30] sm:$0xf]
      %v1292 = vld [vmem:[%s4 + $0x34] sm:$0xf]
      %v1293 = vld [vmem:[%s4 + $0x38] sm:$0xf]
      %v1294 = vld [vmem:[%s4 + $0x3c] sm:$0xf]
      %v1295 = vld [vmem:[%s5] sm:$0xff]
      %v1296 = vld [vmem:[%s5 + $0x8] sm:$0xff]
      %v1297 = vld [vmem:[%s5 + $0x10] sm:$0xff]
      %v1298 = vld [vmem:[%s5 + $0x18] sm:$0xff]
      %v1299 = vld [vmem:[%s5 + $0x20] sm:$0xff]
      %v1300 = vld [vmem:[%s5 + $0x28] sm:$0xff]
      %v1301 = vld [vmem:[%s5 + $0x30] sm:$0xff]
      %v1302 = vld [vmem:[%s5 + $0x38] sm:$0xff]
      %v1303 = vld [vmem:[%s5 + $0x40] sm:$0xff]
      %v1304 = vld [vmem:[%s5 + $0x48] sm:$0xff]
      %v1305 = vld [vmem:[%s5 + $0x50] sm:$0xff]
      %v1306 = vld [vmem:[%s5 + $0x58] sm:$0xff]
      %v1307 = vld [vmem:[%s5 + $0x60] sm:$0xff]
      %v1308 = vld [vmem:[%s5 + $0x68] sm:$0xff]
      %v1309 = vld [vmem:[%s5 + $0x70] sm:$0xff]
      %v1310 = vld [vmem:[%s5 + $0x78] sm:$0xff]
      %1312 = vset.pattern.permute.xlu0 0
      %1313 = vperm.xlu0 %1312, %v1295
      %v1314 = vpop.permute.xlu0 %1313
      %1317 = vset.pattern.permute.xlu0 0
      %1318 = vperm.xlu0 %1317, %v1296
      %v1319 = vpop.permute.xlu0 %1318
      %1322 = vset.pattern.permute.xlu0 0
      %1323 = vperm.xlu0 %1322, %v1297
      %v1324 = vpop.permute.xlu0 %1323
      %1327 = vset.pattern.permute.xlu0 0
      %1328 = vperm.xlu0 %1327, %v1298
      %v1329 = vpop.permute.xlu0 %1328
      %1332 = vset.pattern.permute.xlu0 0
      %1333 = vperm.xlu0 %1332, %v1299
      %v1334 = vpop.permute.xlu0 %1333
      %1337 = vset.pattern.permute.xlu0 0
      %1338 = vperm.xlu0 %1337, %v1300
      %v1339 = vpop.permute.xlu0 %1338
      %1342 = vset.pattern.permute.xlu0 0
      %1343 = vperm.xlu0 %1342, %v1301
      %v1344 = vpop.permute.xlu0 %1343
      %1347 = vset.pattern.permute.xlu0 0
      %1348 = vperm.xlu0 %1347, %v1302
      %v1349 = vpop.permute.xlu0 %1348
      %1352 = vset.pattern.permute.xlu0 0
      %1353 = vperm.xlu0 %1352, %v1303
      %v1354 = vpop.permute.xlu0 %1353
      %1357 = vset.pattern.permute.xlu0 0
      %1358 = vperm.xlu0 %1357, %v1304
      %v1359 = vpop.permute.xlu0 %1358
      %1362 = vset.pattern.permute.xlu0 0
      %1363 = vperm.xlu0 %1362, %v1305
      %v1364 = vpop.permute.xlu0 %1363
      %1367 = vset.pattern.permute.xlu0 0
      %1368 = vperm.xlu0 %1367, %v1306
      %v1369 = vpop.permute.xlu0 %1368
      %1372 = vset.pattern.permute.xlu0 0
      %1373 = vperm.xlu0 %1372, %v1307
      %v1374 = vpop.permute.xlu0 %1373
      %1377 = vset.pattern.permute.xlu0 0
      %1378 = vperm.xlu0 %1377, %v1308
      %v1379 = vpop.permute.xlu0 %1378
      %1382 = vset.pattern.permute.xlu0 0
      %1383 = vperm.xlu0 %1382, %v1309
      %v1384 = vpop.permute.xlu0 %1383
      %1387 = vset.pattern.permute.xlu0 0
      %1388 = vperm.xlu0 %1387, %v1310
      %v1389 = vpop.permute.xlu0 %1388
      %v1407 = vunpack.c.l.b16 %v1279
      %v1408 = vunpack.c.l.b16 %v1280
      %v1409 = vunpack.c.l.b16 %v1281
      %v1410 = vunpack.c.l.b16 %v1282
      %v1411 = vunpack.c.l.b16 %v1283
      %v1412 = vunpack.c.l.b16 %v1284
      %v1413 = vunpack.c.l.b16 %v1285
      %v1414 = vunpack.c.l.b16 %v1286
      %v1415 = vunpack.c.l.b16 %v1287
      %v1416 = vunpack.c.l.b16 %v1288
      %v1417 = vunpack.c.l.b16 %v1289
      %v1418 = vunpack.c.l.b16 %v1290
      %v1419 = vunpack.c.l.b16 %v1291
      %v1420 = vunpack.c.l.b16 %v1292
      %v1421 = vunpack.c.l.b16 %v1293
      %v1422 = vunpack.c.l.b16 %v1294
      %v1423 = vpack.c.b16 %v1408, %v1407
      %v1424 = vpack.c.b16 %v1410, %v1409
      %v1425 = vpack.c.b16 %v1412, %v1411
      %v1426 = vpack.c.b16 %v1414, %v1413
      %v1427 = vpack.c.b16 %v1416, %v1415
      %v1428 = vpack.c.b16 %v1418, %v1417
      %v1429 = vpack.c.b16 %v1420, %v1419
      %v1430 = vpack.c.b16 %v1422, %v1421
      %1439 = vmatprep.subr.bf16.mxu0 %v1248
      %1440 = vmatpush1.bf16.msra.mxu0 %v1247
      %1441 = vmatprep.subr.bf16.mxu0 %v1252
      %1442 = vmatpush1.bf16.msra.mxu0 %v1251
      %1443 = vmatprep.subr.bf16.mxu0 %v1256
      %1444 = vmatpush1.bf16.msra.mxu0 %v1255
      %1445 = vmatprep.subr.bf16.mxu0 %v1260
      %1446 = vmatpush1.bf16.msra.mxu0 %v1259
      %1447 = vmatprep.subr.bf16.mxu0 %v1264
      %1448 = vmatpush1.bf16.msra.mxu0 %v1263
      %1449 = vmatprep.subr.bf16.mxu0 %v1268
      %1450 = vmatpush1.bf16.msra.mxu0 %v1267
      %1451 = vmatprep.subr.bf16.mxu0 %v1272
      %1452 = vmatpush1.bf16.msra.mxu0 %v1271
      %1453 = vmatprep.subr.bf16.mxu0 %v1276
      %1454 = vmatpush1.bf16.msra.mxu0 %v1275
      %1455 = vmatprep.subr.bf16.mxu0 0
      %1456 = vmatpush1.bf16.msra.mxu0 0
      %1457 = vmatprep.subr.bf16.mxu0 0
      %1458 = vmatpush1.bf16.msra.mxu0 0
      %1459 = vmatprep.subr.bf16.mxu0 0
      %1460 = vmatpush1.bf16.msra.mxu0 0
      %1461 = vmatprep.subr.bf16.mxu0 0
      %1462 = vmatpush1.bf16.msra.mxu0 0
      %1463 = vmatprep.subr.bf16.mxu0 0
      %1464 = vmatpush1.bf16.msra.mxu0 0
      %1465 = vmatprep.subr.bf16.mxu0 0
      %1466 = vmatpush1.bf16.msra.mxu0 0
      %1467 = vmatprep.subr.bf16.mxu0 0
      %1468 = vmatpush1.bf16.msra.mxu0 0
      %1469 = vmatprep.subr.bf16.mxu0 0
      %1470 = vmatpush1.bf16.msra.mxu0 0
      %1471 = vmatprep.mubr.bf16.mxu0 0
      %1472 = vmatmul.mubr.bf16.gmra.mrb[0].mxu0 %v1423
      %v1473 = vpop.f32.mrb[0].mxu0
      %v1474 = vadd.f32 %v1314, %v1473
      %v1475 = vpop.f32.mrb[0].mxu0
      %v1476 = vadd.f32 %v1314, %v1475
      %v1477 = vpop.f32.mrb[0].mxu0
      %v1478 = vadd.f32 %v1319, %v1477
      %v1479 = vpop.f32.mrb[0].mxu0
      %v1480 = vadd.f32 %v1319, %v1479
      %1481 = vmatprep.mubr.bf16.mxu0 0
      %1482 = vmatmul.mubr.bf16.gmra.mrb[0].mxu0 %v1424
      %v1483 = vpop.f32.mrb[0].mxu0
      %v1484 = vadd.f32 %v1324, %v1483
      %v1485 = vpop.f32.mrb[0].mxu0
      %v1486 = vadd.f32 %v1324, %v1485
      %v1487 = vpop.f32.mrb[0].mxu0
      %v1488 = vadd.f32 %v1329, %v1487
      %v1489 = vpop.f32.mrb[0].mxu0
      %v1490 = vadd.f32 %v1329, %v1489
      %1491 = vmatprep.mubr.bf16.mxu0 0
      %1492 = vmatmul.mubr.bf16.gmra.mrb[0].mxu0 %v1425
      %v1493 = vpop.f32.mrb[0].mxu0
      %v1494 = vadd.f32 %v1334, %v1493
      %v1495 = vpop.f32.mrb[0].mxu0
      %v1496 = vadd.f32 %v1334, %v1495
      %v1497 = vpop.f32.mrb[0].mxu0
      %v1498 = vadd.f32 %v1339, %v1497
      %v1499 = vpop.f32.mrb[0].mxu0
      %v1500 = vadd.f32 %v1339, %v1499
      %1501 = vmatprep.mubr.bf16.mxu0 0
      %1502 = vmatmul.mubr.bf16.gmra.mrb[0].mxu0 %v1426
      %v1503 = vpop.f32.mrb[0].mxu0
      %v1504 = vadd.f32 %v1344, %v1503
      %v1505 = vpop.f32.mrb[0].mxu0
      %v1506 = vadd.f32 %v1344, %v1505
      %v1507 = vpop.f32.mrb[0].mxu0
      %v1508 = vadd.f32 %v1349, %v1507
      %v1509 = vpop.f32.mrb[0].mxu0
      %v1510 = vadd.f32 %v1349, %v1509
      %1511 = vmatprep.mubr.bf16.mxu0 0
      %1512 = vmatmul.mubr.bf16.gmra.mrb[0].mxu0 %v1427
      %v1513 = vpop.f32.mrb[0].mxu0
      %v1514 = vadd.f32 %v1354, %v1513
      %v1515 = vpop.f32.mrb[0].mxu0
      %v1516 = vadd.f32 %v1354, %v1515
      %v1517 = vpop.f32.mrb[0].mxu0
      %v1518 = vadd.f32 %v1359, %v1517
      %v1519 = vpop.f32.mrb[0].mxu0
      %v1520 = vadd.f32 %v1359, %v1519
      %1521 = vmatprep.mubr.bf16.mxu0 0
      %1522 = vmatmul.mubr.bf16.gmra.mrb[0].mxu0 %v1428
      %v1523 = vpop.f32.mrb[0].mxu0
      %v1524 = vadd.f32 %v1364, %v1523
      %v1525 = vpop.f32.mrb[0].mxu0
      %v1526 = vadd.f32 %v1364, %v1525
      %v1527 = vpop.f32.mrb[0].mxu0
      %v1528 = vadd.f32 %v1369, %v1527
      %v1529 = vpop.f32.mrb[0].mxu0
      %v1530 = vadd.f32 %v1369, %v1529
      %1531 = vmatprep.mubr.bf16.mxu0 0
      %1532 = vmatmul.mubr.bf16.gmra.mrb[0].mxu0 %v1429
      %v1533 = vpop.f32.mrb[0].mxu0
      %v1534 = vadd.f32 %v1374, %v1533
      %v1535 = vpop.f32.mrb[0].mxu0
      %v1536 = vadd.f32 %v1374, %v1535
      %v1537 = vpop.f32.mrb[0].mxu0
      %v1538 = vadd.f32 %v1379, %v1537
      %v1539 = vpop.f32.mrb[0].mxu0
      %v1540 = vadd.f32 %v1379, %v1539
      %1541 = vmatprep.mubr.bf16.mxu0 0
      %1542 = vmatmul.mubr.bf16.gmra.mrb[0].mxu0 %v1430
      %v1543 = vpop.f32.mrb[0].mxu0
      %v1544 = vadd.f32 %v1384, %v1543
      %v1545 = vpop.f32.mrb[0].mxu0
      %v1546 = vadd.f32 %v1384, %v1545
      %v1547 = vpop.f32.mrb[0].mxu0
      %v1548 = vadd.f32 %v1389, %v1547
      %v1549 = vpop.f32.mrb[0].mxu0
      %v1550 = vadd.f32 %v1389, %v1549
      %1551 = vdwg.mxu0
      %1552 = vmatprep.subr.bf16.mxu0 %v1250
      %1553 = vmatpush1.bf16.msra.mxu0 %v1249
      %1554 = vmatprep.subr.bf16.mxu0 %v1254
      %1555 = vmatpush1.bf16.msra.mxu0 %v1253
      %1556 = vmatprep.subr.bf16.mxu0 %v1258
      %1557 = vmatpush1.bf16.msra.mxu0 %v1257
      %1558 = vmatprep.subr.bf16.mxu0 %v1262
      %1559 = vmatpush1.bf16.msra.mxu0 %v1261
      %1560 = vmatprep.subr.bf16.mxu0 %v1266
      %1561 = vmatpush1.bf16.msra.mxu0 %v1265
      %1562 = vmatprep.subr.bf16.mxu0 %v1270
      %1563 = vmatpush1.bf16.msra.mxu0 %v1269
      %1564 = vmatprep.subr.bf16.mxu0 %v1274
      %1565 = vmatpush1.bf16.msra.mxu0 %v1273
      %1566 = vmatprep.subr.bf16.mxu0 %v1278
      %1567 = vmatpush1.bf16.msra.mxu0 %v1277
      %1568 = vmatprep.subr.bf16.mxu0 0
      %1569 = vmatpush1.bf16.msra.mxu0 0
      %1570 = vmatprep.subr.bf16.mxu0 0
      %1571 = vmatpush1.bf16.msra.mxu0 0
      %1572 = vmatprep.subr.bf16.mxu0 0
      %1573 = vmatpush1.bf16.msra.mxu0 0
      %1574 = vmatprep.subr.bf16.mxu0 0
      %1575 = vmatpush1.bf16.msra.mxu0 0
      %1576 = vmatprep.subr.bf16.mxu0 0
      %1577 = vmatpush1.bf16.msra.mxu0 0
      %1578 = vmatprep.subr.bf16.mxu0 0
      %1579 = vmatpush1.bf16.msra.mxu0 0
      %1580 = vmatprep.subr.bf16.mxu0 0
      %1581 = vmatpush1.bf16.msra.mxu0 0
      %1582 = vmatprep.subr.bf16.mxu0 0
      %1583 = vmatpush1.bf16.msra.mxu0 0
      %1584 = vmatprep.mubr.bf16.mxu0 0
      %1585 = vmatmul.mubr.bf16.gmra.mrb[0].mxu0 %v1423
      %v1586 = vpop.f32.mrb[0].mxu0
      %v1587 = vadd.f32 %v1314, %v1586
      %v1588 = vpop.f32.mrb[0].mxu0
      %v1589 = vadd.f32 %v1314, %v1588
      %v1590 = vpop.f32.mrb[0].mxu0
      %v1591 = vadd.f32 %v1319, %v1590
      %v1592 = vpop.f32.mrb[0].mxu0
      %v1593 = vadd.f32 %v1319, %v1592
      %1594 = vmatprep.mubr.bf16.mxu0 0
      %1595 = vmatmul.mubr.bf16.gmra.mrb[0].mxu0 %v1424
      %v1596 = vpop.f32.mrb[0].mxu0
      %v1597 = vadd.f32 %v1324, %v1596
      %v1598 = vpop.f32.mrb[0].mxu0
      %v1599 = vadd.f32 %v1324, %v1598
      %v1600 = vpop.f32.mrb[0].mxu0
      %v1601 = vadd.f32 %v1329, %v1600
      %v1602 = vpop.f32.mrb[0].mxu0
      %v1603 = vadd.f32 %v1329, %v1602
      %1604 = vmatprep.mubr.bf16.mxu0 0
      %1605 = vmatmul.mubr.bf16.gmra.mrb[0].mxu0 %v1425
      %v1606 = vpop.f32.mrb[0].mxu0
      %v1607 = vadd.f32 %v1334, %v1606
      %v1608 = vpop.f32.mrb[0].mxu0
      %v1609 = vadd.f32 %v1334, %v1608
      %v1610 = vpop.f32.mrb[0].mxu0
      %v1611 = vadd.f32 %v1339, %v1610
      %v1612 = vpop.f32.mrb[0].mxu0
      %v1613 = vadd.f32 %v1339, %v1612
      %1614 = vmatprep.mubr.bf16.mxu0 0
      %1615 = vmatmul.mubr.bf16.gmra.mrb[0].mxu0 %v1426
      %v1616 = vpop.f32.mrb[0].mxu0
      %v1617 = vadd.f32 %v1344, %v1616
      %v1618 = vpop.f32.mrb[0].mxu0
      %v1619 = vadd.f32 %v1344, %v1618
      %v1620 = vpop.f32.mrb[0].mxu0
      %v1621 = vadd.f32 %v1349, %v1620
      %v1622 = vpop.f32.mrb[0].mxu0
      %v1623 = vadd.f32 %v1349, %v1622
      %1624 = vmatprep.mubr.bf16.mxu0 0
      %1625 = vmatmul.mubr.bf16.gmra.mrb[0].mxu0 %v1427
      %v1626 = vpop.f32.mrb[0].mxu0
      %v1627 = vadd.f32 %v1354, %v1626
      %v1628 = vpop.f32.mrb[0].mxu0
      %v1629 = vadd.f32 %v1354, %v1628
      %v1630 = vpop.f32.mrb[0].mxu0
      %v1631 = vadd.f32 %v1359, %v1630
      %v1632 = vpop.f32.mrb[0].mxu0
      %v1633 = vadd.f32 %v1359, %v1632
      %1634 = vmatprep.mubr.bf16.mxu0 0
      %1635 = vmatmul.mubr.bf16.gmra.mrb[0].mxu0 %v1428
      %v1636 = vpop.f32.mrb[0].mxu0
      %v1637 = vadd.f32 %v1364, %v1636
      %v1638 = vpop.f32.mrb[0].mxu0
      %v1639 = vadd.f32 %v1364, %v1638
      %v1640 = vpop.f32.mrb[0].mxu0
      %v1641 = vadd.f32 %v1369, %v1640
      %v1642 = vpop.f32.mrb[0].mxu0
      %v1643 = vadd.f32 %v1369, %v1642
      %1644 = vmatprep.mubr.bf16.mxu0 0
      %1645 = vmatmul.mubr.bf16.gmra.mrb[0].mxu0 %v1429
      %v1646 = vpop.f32.mrb[0].mxu0
      %v1647 = vadd.f32 %v1374, %v1646
      %v1648 = vpop.f32.mrb[0].mxu0
      %v1649 = vadd.f32 %v1374, %v1648
      %v1650 = vpop.f32.mrb[0].mxu0
      %v1651 = vadd.f32 %v1379, %v1650
      %v1652 = vpop.f32.mrb[0].mxu0
      %v1653 = vadd.f32 %v1379, %v1652
      %1654 = vmatprep.mubr.bf16.mxu0 0
      %1655 = vmatmul.mubr.bf16.gmra.mrb[0].mxu0 %v1430
      %v1656 = vpop.f32.mrb[0].mxu0
      %v1657 = vadd.f32 %v1384, %v1656
      %v1658 = vpop.f32.mrb[0].mxu0
      %v1659 = vadd.f32 %v1384, %v1658
      %v1660 = vpop.f32.mrb[0].mxu0
      %v1661 = vadd.f32 %v1389, %v1660
      %v1662 = vpop.f32.mrb[0].mxu0
      %v1663 = vadd.f32 %v1389, %v1662
      %1664 = vdwg.mxu0
      %v1665 = vmax.f32 %v1474, 0.0
      %v1666 = vmax.f32 %v1476, 0.0
      %v1667 = vmax.f32 %v1587, 0.0
      %v1668 = vmax.f32 %v1589, 0.0
      %v1669 = vmax.f32 %v1478, 0.0
      %v1670 = vmax.f32 %v1480, 0.0
      %v1671 = vmax.f32 %v1591, 0.0
      %v1672 = vmax.f32 %v1593, 0.0
      %v1673 = vmax.f32 %v1484, 0.0
      %v1674 = vmax.f32 %v1486, 0.0
      %v1675 = vmax.f32 %v1597, 0.0
      %v1676 = vmax.f32 %v1599, 0.0
      %v1677 = vmax.f32 %v1488, 0.0
      %v1678 = vmax.f32 %v1490, 0.0
      %v1679 = vmax.f32 %v1601, 0.0
      %v1680 = vmax.f32 %v1603, 0.0
      %v1681 = vmax.f32 %v1494, 0.0
      %v1682 = vmax.f32 %v1496, 0.0
      %v1683 = vmax.f32 %v1607, 0.0
      %v1684 = vmax.f32 %v1609, 0.0
      %v1685 = vmax.f32 %v1498, 0.0
      %v1686 = vmax.f32 %v1500, 0.0
      %v1687 = vmax.f32 %v1611, 0.0
      %v1688 = vmax.f32 %v1613, 0.0
      %v1689 = vmax.f32 %v1504, 0.0
      %v1690 = vmax.f32 %v1506, 0.0
      %v1691 = vmax.f32 %v1617, 0.0
      %v1692 = vmax.f32 %v1619, 0.0
      %v1693 = vmax.f32 %v1508, 0.0
      %v1694 = vmax.f32 %v1510, 0.0
      %v1695 = vmax.f32 %v1621, 0.0
      %v1696 = vmax.f32 %v1623, 0.0
      %v1697 = vmax.f32 %v1514, 0.0
      %v1698 = vmax.f32 %v1516, 0.0
      %v1699 = vmax.f32 %v1627, 0.0
      %v1700 = vmax.f32 %v1629, 0.0
      %v1701 = vmax.f32 %v1518, 0.0
      %v1702 = vmax.f32 %v1520, 0.0
      %v1703 = vmax.f32 %v1631, 0.0
      %v1704 = vmax.f32 %v1633, 0.0
      %v1705 = vmax.f32 %v1524, 0.0
      %v1706 = vmax.f32 %v1526, 0.0
      %v1707 = vmax.f32 %v1637, 0.0
      %v1708 = vmax.f32 %v1639, 0.0
      %v1709 = vmax.f32 %v1528, 0.0
      %v1710 = vmax.f32 %v1530, 0.0
      %v1711 = vmax.f32 %v1641, 0.0
      %v1712 = vmax.f32 %v1643, 0.0
      %v1713 = vmax.f32 %v1534, 0.0
      %v1714 = vmax.f32 %v1536, 0.0
      %v1715 = vmax.f32 %v1647, 0.0
      %v1716 = vmax.f32 %v1649, 0.0
      %v1717 = vmax.f32 %v1538, 0.0
      %v1718 = vmax.f32 %v1540, 0.0
      %v1719 = vmax.f32 %v1651, 0.0
      %v1720 = vmax.f32 %v1653, 0.0
      %v1721 = vmax.f32 %v1544, 0.0
      %v1722 = vmax.f32 %v1546, 0.0
      %v1723 = vmax.f32 %v1657, 0.0
      %v1724 = vmax.f32 %v1659, 0.0
      %v1725 = vmax.f32 %v1548, 0.0
      %v1726 = vmax.f32 %v1550, 0.0
      %v1727 = vmax.f32 %v1661, 0.0
      %v1728 = vmax.f32 %v1663, 0.0
      %v1729 = vpack.c.bf16 %v1669, %v1665
      %v1730 = vpack.c.bf16 %v1670, %v1666
      %v1731 = vpack.c.bf16 %v1671, %v1667
      %v1732 = vpack.c.bf16 %v1672, %v1668
      %v1733 = vpack.c.bf16 %v1677, %v1673
      %v1734 = vpack.c.bf16 %v1678, %v1674
      %v1735 = vpack.c.bf16 %v1679, %v1675
      %v1736 = vpack.c.bf16 %v1680, %v1676
      %v1737 = vpack.c.bf16 %v1685, %v1681
      %v1738 = vpack.c.bf16 %v1686, %v1682
      %v1739 = vpack.c.bf16 %v1687, %v1683
      %v1740 = vpack.c.bf16 %v1688, %v1684
      %v1741 = vpack.c.bf16 %v1693, %v1689
      %v1742 = vpack.c.bf16 %v1694, %v1690
      %v1743 = vpack.c.bf16 %v1695, %v1691
      %v1744 = vpack.c.bf16 %v1696, %v1692
      %v1745 = vpack.c.bf16 %v1701, %v1697
      %v1746 = vpack.c.bf16 %v1702, %v1698
      %v1747 = vpack.c.bf16 %v1703, %v1699
      %v1748 = vpack.c.bf16 %v1704, %v1700
      %v1749 = vpack.c.bf16 %v1709, %v1705
      %v1750 = vpack.c.bf16 %v1710, %v1706
      %v1751 = vpack.c.bf16 %v1711, %v1707
      %v1752 = vpack.c.bf16 %v1712, %v1708
      %v1753 = vpack.c.bf16 %v1717, %v1713
      %v1754 = vpack.c.bf16 %v1718, %v1714
      %v1755 = vpack.c.bf16 %v1719, %v1715
      %v1756 = vpack.c.bf16 %v1720, %v1716
      %v1757 = vpack.c.bf16 %v1725, %v1721
      %v1758 = vpack.c.bf16 %v1726, %v1722
      %v1759 = vpack.c.bf16 %v1727, %v1723
      %v1760 = vpack.c.bf16 %v1728, %v1724
      %v1761 = vld [vmem:[%s6] sm:$0xf]
      %1762 = vmatprep.subr.bf16.mxu0 %v1730
      %1763 = vmatpush1.bf16.msra.mxu0 %v1729
      %1764 = vmatprep.subr.bf16.mxu0 %v1734
      %1765 = vmatpush1.bf16.msra.mxu0 %v1733
      %1766 = vmatprep.subr.bf16.mxu0 %v1738
      %1767 = vmatpush1.bf16.msra.mxu0 %v1737
      %1768 = vmatprep.subr.bf16.mxu0 %v1742
      %1769 = vmatpush1.bf16.msra.mxu0 %v1741
      %1770 = vmatprep.subr.bf16.mxu0 %v1746
      %1771 = vmatpush1.bf16.msra.mxu0 %v1745
      %1772 = vmatprep.subr.bf16.mxu0 %v1750
      %1773 = vmatpush1.bf16.msra.mxu0 %v1749
      %1774 = vmatprep.subr.bf16.mxu0 %v1754
      %1775 = vmatpush1.bf16.msra.mxu0 %v1753
      %1776 = vmatprep.subr.bf16.mxu0 %v1758
      %1777 = vmatpush1.bf16.msra.mxu0 %v1757
      %1778 = vmatprep.subr.bf16.mxu0 0
      %1779 = vmatpush1.bf16.msra.mxu0 0
      %1780 = vmatprep.subr.bf16.mxu0 0
      %1781 = vmatpush1.bf16.msra.mxu0 0
      %1782 = vmatprep.subr.bf16.mxu0 0
      %1783 = vmatpush1.bf16.msra.mxu0 0
      %1784 = vmatprep.subr.bf16.mxu0 0
      %1785 = vmatpush1.bf16.msra.mxu0 0
      %1786 = vmatprep.subr.bf16.mxu0 0
      %1787 = vmatpush1.bf16.msra.mxu0 0
      %1788 = vmatprep.subr.bf16.mxu0 0
      %1789 = vmatpush1.bf16.msra.mxu0 0
      %1790 = vmatprep.subr.bf16.mxu0 0
      %1791 = vmatpush1.bf16.msra.mxu0 0
      %1792 = vmatprep.subr.bf16.mxu0 0
      %1793 = vmatpush1.bf16.msra.mxu0 0
      %1794 = vmatprep.mubr.bf16.mxu0 0
      %1795 = vmatmul.mubr.bf16.gmra.mrb[0].mxu0 %v1761
      %v1796 = vpop.f32.mrb[0].mxu0
      %v1797 = vadd.f32 0.0, %v1796
      %v1798 = vpop.f32.mrb[0].mxu0
      %v1799 = vadd.f32 0.0, %v1798
      %v1800 = vpop.f32.mrb[0].mxu0
      %v1801 = vpop.f32.mrb[0].mxu0
      %1802 = vdwg.mxu0
      %1803 = vmatprep.subr.bf16.mxu0 %v1732
      %1804 = vmatpush1.bf16.msra.mxu0 %v1731
      %1805 = vmatprep.subr.bf16.mxu0 %v1736
      %1806 = vmatpush1.bf16.msra.mxu0 %v1735
      %1807 = vmatprep.subr.bf16.mxu0 %v1740
      %1808 = vmatpush1.bf16.msra.mxu0 %v1739
      %1809 = vmatprep.subr.bf16.mxu0 %v1744
      %1810 = vmatpush1.bf16.msra.mxu0 %v1743
      %1811 = vmatprep.subr.bf16.mxu0 %v1748
      %1812 = vmatpush1.bf16.msra.mxu0 %v1747
      %1813 = vmatprep.subr.bf16.mxu0 %v1752
      %1814 = vmatpush1.bf16.msra.mxu0 %v1751
      %1815 = vmatprep.subr.bf16.mxu0 %v1756
      %1816 = vmatpush1.bf16.msra.mxu0 %v1755
      %1817 = vmatprep.subr.bf16.mxu0 %v1760
      %1818 = vmatpush1.bf16.msra.mxu0 %v1759
      %1819 = vmatprep.subr.bf16.mxu0 0
      %1820 = vmatpush1.bf16.msra.mxu0 0
      %1821 = vmatprep.subr.bf16.mxu0 0
      %1822 = vmatpush1.bf16.msra.mxu0 0
      %1823 = vmatprep.subr.bf16.mxu0 0
      %1824 = vmatpush1.bf16.msra.mxu0 0
      %1825 = vmatprep.subr.bf16.mxu0 0
      %1826 = vmatpush1.bf16.msra.mxu0 0
      %1827 = vmatprep.subr.bf16.mxu0 0
      %1828 = vmatpush1.bf16.msra.mxu0 0
      %1829 = vmatprep.subr.bf16.mxu0 0
      %1830 = vmatpush1.bf16.msra.mxu0 0
      %1831 = vmatprep.subr.bf16.mxu0 0
      %1832 = vmatpush1.bf16.msra.mxu0 0
      %1833 = vmatprep.subr.bf16.mxu0 0
      %1834 = vmatpush1.bf16.msra.mxu0 0
      %1835 = vmatprep.mubr.bf16.mxu0 0
      %1836 = vmatmul.mubr.bf16.gmra.mrb[0].mxu0 %v1761
      %v1837 = vpop.f32.mrb[0].mxu0
      %v1838 = vadd.f32 0.0, %v1837
      %v1839 = vpop.f32.mrb[0].mxu0
      %v1840 = vadd.f32 0.0, %v1839
      %v1841 = vpop.f32.mrb[0].mxu0
      %v1842 = vpop.f32.mrb[0].mxu0
      %1843 = vdwg.mxu0
      %v1844 = vld [vmem:[#allocation2] sm:$0x1]
      %1846 = vset.pattern.permute.xlu0 0
      %1847 = vperm.xlu0 %1846, %v1844
      %v1848 = vpop.permute.xlu0 %1847
      %v1850 = vlaneseq
      %v1851 = vshrl.u32 %v1850, 7
      %v1852 = vsub.s32 0, %v1851
      %v1853 = vrot.slane %v1848, %v1852
      %v1854 = vadd.f32 %v1797, %v1853
      %v1855 = vadd.f32 %v1799, %v1853
      %v1856 = vadd.f32 %v1838, %v1853
      %v1857 = vadd.f32 %v1840, %v1853
      %v1858 = vsub.f32 0.0, %v1854
      %v1859 = vsub.f32 0.0, %v1855
      %v1860 = vsub.f32 0.0, %v1856
      %v1861 = vsub.f32 0.0, %v1857
      %v1862 = vmul.f32 %v1858, 1.442695
      %v1863 = vpow.pop %v1862
      %v1864 = vmul.f32 %v1859, 1.442695
      %v1865 = vpow.pop %v1864
      %v1866 = vmul.f32 %v1860, 1.442695
      %v1867 = vpow.pop %v1866
      %v1868 = vmul.f32 %v1861, 1.442695
      %v1869 = vpow.pop %v1868
      %v1870 = vadd.f32 %v1863, 1.0
      %v1871 = vadd.f32 %v1865, 1.0
      %v1872 = vadd.f32 %v1867, 1.0
      %v1873 = vadd.f32 %v1869, 1.0
      %v1874 = vrcp.pop %v1870
      %v1875 = vrcp.pop %v1871
      %v1876 = vrcp.pop %v1872
      %v1877 = vrcp.pop %v1873
      %v1882 = vcombine.low %v1874, %v1875
      %v1883 = vcombine.low %v1876, %v1877
      %v1885 = vunpack.c.l.s4 1966171168
      %v1886 = vunpack.c.0.s8 %v1885
      %v1887 = vlaneseq
      %v1888 = vshrl.u32 %v1887, 7
      %v1889 = vsub.s32 %v1886, %v1888
      %v1890 = vrot.slane %v1882, %v1889
      %v1892 = vunpack.c.l.s4 1966171168
      %v1893 = vunpack.c.0.s8 %v1892
      %v1894 = vlaneseq
      %v1895 = vshrl.u32 %v1894, 7
      %v1896 = vsub.s32 %v1893, %v1895
      %v1897 = vrot.slane %v1883, %v1896
      %v1898 = vcombine.low %v1890, %v1897
      %v1900 = vunpack.c.l.s4 1966171168
      %v1901 = vunpack.c.0.s8 %v1900
      %v1902 = vlaneseq
      %v1903 = vshrl.u32 %v1902, 7
      %v1904 = vsub.s32 %v1901, %v1903
      %v1905 = vrot.slane %v1898, %v1904
      %v1907 = vlaneseq
      %vm1908 = vcmp.ge.s32.totalorder %v1907, 0
      %vm1909 = vcmp.lt.s32.totalorder %v1907, 512
      %vm1910 = vmand %vm1908, %vm1909
      %1911 = vst.msk [vmem:[%s307] sm:$0xf] %vm1910, %v1905
      %s1912 = smul.u32 4, %s21
      %p1913 = scmp.lt.s32.totalorder %s1912, 7
      %s1914 = scalar_select %p1913, %s1912, 7
      %s1915 = scalar_lea.vmem %s8, %s1914
      // Predicated region
      $region53: #{amplitude_net_pallas.1} parent=51 // pred_check
        %p1916 = pneg %p212
      $region54: #{amplitude_net_pallas.1} parent=51 // pred_check_branch
        %1918 = sbr.rel (%p1916) target = $region56
      $region55: #{amplitude_net_pallas.1} parent=51 // pred_region
        %s1919 = smul.u32 4, %s21
      $region56: #{amplitude_net_pallas.1} parent=51 // pred_fallthru
        _
    $region52: #{amplitude_net_pallas.1} parent=5 // pred_fallthru
      _
    %p1920 = scmp.le.s32.totalorder 2, %s16
    // Predicated region
    $region57: #{amplitude_net_pallas.1} parent=5 // pred_check
      %p1921 = pneg %p1920
    $region58: #{amplitude_net_pallas.1} parent=5 // pred_check_branch
      %1923 = sbr.rel (%p1921) target = $region60
    $region59: #{amplitude_net_pallas.1} parent=5 // pred_region
      %s1924 = ssub.s32 %s16, 2
      // Predicated region
      $region61: #{amplitude_net_pallas.1} parent=59 // pred_check
        %p1925 = pneg %p218
      $region62: #{amplitude_net_pallas.1} parent=59 // pred_check_branch
        %1927 = sbr.rel (%p1925) target = $region64
      $region63: #{amplitude_net_pallas.1} parent=59 // pred_region
        %s1928 = smul.u32 4, %s22
        %p1929 = scmp.lt.s32.totalorder %s1928, 7
        %s1930 = scalar_select %p1929, %s1928, 7
        %s1931 = scalar_lea.vmem %s8, %s1930
      $region64: #{amplitude_net_pallas.1} parent=59 // pred_fallthru
        _
    $region60: #{amplitude_net_pallas.1} parent=5 // pred_fallthru
      _
  $region6: #{amplitude_net_pallas.1} parent=0 // loop_footer
    %s20 = sadd.s32 1, %s16
  $region7: #{amplitude_net_pallas.1} parent=0 // loop_footer_branch
    %15 = sbr.rel target = $region3
  $region8: #{amplitude_net_pallas.1} parent=0 // loop_exit
    _

</llo_original>
